<compile_context>
chip_gen: v7x
topology: tpu7x:2x2x1
jax: 0.10.0
libtpu: 0.0.40
codegen_flags: <defaults>
</compile_context>

<pallas_src>
import functools
import math

import jax
import jax.numpy as jnp
from jax import lax
from jax.experimental import pallas as pl
from jax.experimental.pallas import tpu as pltpu


NEG_INF = -1e30  # large finite negative -> no exp(-inf - (-inf)) NaN risk


# ---------------------------------------------------------------------------
# Kernel 1: LayerNorm1 + fused QKV projection on one (TQ, E) tile.
# ---------------------------------------------------------------------------
def qkv_kernel(x_ref, ln1_w_ref, ln1_b_ref, wqkv_ref, bqkv_ref,
               q_ref, k_ref, v_ref, *, scale):
    x = x_ref[...]                                      # (TQ, E) f32
    E = x.shape[-1]

    # LayerNorm (eps=1e-5, affine) in f32
    mu = jnp.mean(x, axis=-1, keepdims=True)
    var = jnp.mean((x - mu) ** 2, axis=-1, keepdims=True)
    h = (x - mu) * lax.rsqrt(var + 1e-5)
    h = h * ln1_w_ref[...] + ln1_b_ref[...]

    # one fused (TQ, E) @ (E, 3E) matmul, bf16 inputs, f32 accumulation
    qkv = jnp.dot(h.astype(jnp.bfloat16), wqkv_ref[...],
                  preferred_element_type=jnp.float32) + bqkv_ref[...]

    q_ref[...] = (qkv[:, :E] * scale).astype(jnp.bfloat16)   # fold 1/sqrt(E)
    k_ref[...] = qkv[:, E:2 * E].astype(jnp.bfloat16)
    v_ref[...] = qkv[:, 2 * E:].astype(jnp.bfloat16)


# ---------------------------------------------------------------------------
# Kernel 2: causal flash attention (online softmax over KV tiles) + out-proj +
#           residual + LayerNorm2 + MLP + residual, per (TQ, E) query tile.
# ---------------------------------------------------------------------------
def attn_mlp_kernel(x_ref, q_ref, k_ref, v_ref,
                    wo_ref, bo_ref, ln2_w_ref, ln2_b_ref,
                    w1_ref, b1_ref, w2_ref, b2_ref,
                    o_ref, m_scr, l_scr, acc_scr, *, tq, tk):
    qi = pl.program_id(1)
    ki = pl.program_id(2)

    first_q = qi * tq
    last_q = first_q + (tq - 1)
    first_k = ki * tk
    last_k = first_k + (tk - 1)
    last_valid_ki = last_q // tk     # last KV tile intersecting the causal past

    @pl.when(ki == 0)
    def _init():
        m_scr[...] = jnp.full_like(m_scr, NEG_INF)
        l_scr[...] = jnp.zeros_like(l_scr)
        acc_scr[...] = jnp.zeros_like(acc_scr)

    def scores():
        # contract last dims directly -> no materialized k.T transpose
        return lax.dot_general(q_ref[...], k_ref[...], (((1,), (1,)), ((), ())),
                               preferred_element_type=jnp.float32)  # (tq,tk) f32

    def flash_update(s):
        m_prev = m_scr[...]
        m_new = jnp.maximum(m_prev, jnp.max(s, axis=-1, keepdims=True))
        alpha = jnp.exp(m_prev - m_new)
        p = jnp.exp(s - m_new)
        l_scr[...] = alpha * l_scr[...] + jnp.sum(p, axis=-1, keepdims=True)
        acc_scr[...] = alpha * acc_scr[...] + jnp.dot(
            p.astype(jnp.bfloat16), v_ref[...],
            preferred_element_type=jnp.float32)
        m_scr[...] = m_new

    # Fully-visible (strictly past) KV tile: no mask needed at all.
    @pl.when(last_k <= first_q)
    def _past_tile():
        flash_update(scores())

    # Diagonal-straddling tile: apply the causal mask (cheap broadcast iotas).
    @pl.when(jnp.logical_and(first_k <= last_q, last_k > first_q))
    def _diag_tile():
        s = scores()
        row = first_q + lax.broadcasted_iota(jnp.int32, (tq, 1), 0)
        col = first_k + lax.broadcasted_iota(jnp.int32, (1, tk), 1)
        s = jnp.where(row >= col, s, NEG_INF)
        flash_update(s)

    # Fully-future tiles (ki > last_valid_ki) do nothing: compute is skipped
    # above and their DMA is skipped by the clamped k/v index_map.

    @pl.when(ki == last_valid_ki)
    def _finalize():
        x = x_ref[...]                                  # (tq, E) f32

        # softmax normalization via EUP reciprocal (free slot vs VALU divide)
        attn = acc_scr[...] * pl.reciprocal(l_scr[...], approx=True)
        attn = jnp.dot(attn.astype(jnp.bfloat16), wo_ref[...],
                       preferred_element_type=jnp.float32) + bo_ref[...]
        x1 = x + attn                                   # first residual (f32)

        # LayerNorm2 in f32
        mu = jnp.mean(x1, axis=-1, keepdims=True)
        var = jnp.mean((x1 - mu) ** 2, axis=-1, keepdims=True)
        h2 = (x1 - mu) * lax.rsqrt(var + 1e-5)
        h2 = h2 * ln2_w_ref[...] + ln2_b_ref[...]

        # MLP on the (tq, E) tile only: (tq, 4E) hidden never leaves VMEM
        hidden = jnp.dot(h2.astype(jnp.bfloat16), w1_ref[...],
                         preferred_element_type=jnp.float32) + b1_ref[...]
        hidden = jax.nn.gelu(hidden, approximate=True)  # GPT-2 tanh GELU, f32
        mlp = jnp.dot(hidden.astype(jnp.bfloat16), w2_ref[...],
                      preferred_element_type=jnp.float32) + b2_ref[...]

        o_ref[...] = (x1 + mlp).astype(o_ref.dtype)     # second residual


# ---------------------------------------------------------------------------
# One-time weight preparation (fused QKV, bf16 weights, f32 biases).
# Do this once at init, NOT per forward call.
# ---------------------------------------------------------------------------
def prepare_params(p):
    bf = jnp.bfloat16
    return {
        "ln1_w": p["ln1_w"], "ln1_b": p["ln1_b"],
        "ln2_w": p["ln2_w"], "ln2_b": p["ln2_b"],
        "wqkv": jnp.concatenate([p["wq"], p["wk"], p["wv"]], axis=1).astype(bf),
        "bqkv": jnp.concatenate([p["bq"], p["bk"], p["bv"]], axis=1),
        "wo": p["wo"].astype(bf), "bo": p["bo"],
        "w1": p["w1"].astype(bf), "b1": p["b1"],
        "w2": p["w2"].astype(bf), "b2": p["b2"],
    }


# ---------------------------------------------------------------------------
# Wrapper
# ---------------------------------------------------------------------------
def transformer_block(x, prep, *, tq=256, tk=256):
    B, T, E = x.shape
    tq = min(tq, T)
    tk = min(tk, T)
    assert T % tq == 0 and T % tk == 0, "T must be divisible by the tile sizes"

    bf = jnp.bfloat16
    f32 = jnp.float32
    H = 4 * E
    nq, nk = T // tq, T // tk

    # ---- explicit VMEM budgets (double-buffered tiles + resident weights) ----
    k1_bytes = 2 * (tq * E * 4                 # x tile (f32)
                    + E * 3 * E * 2            # wqkv (bf16, resident)
                    + 3 * tq * E * 2           # q,k,v output tiles (bf16)
                    + 8 * E * 4)               # LN params / biases
    k2_bytes = (2 * (tq * E * 4 + tq * E * 2 + 2 * tk * E * 2   # x,q,k,v tiles
                     + tq * E * 4                               # output tile
                     + (E * E + 2 * E * H) * 2                  # wo,w1,w2 bf16
                     + 12 * E * 4)                              # biases / LN
                + tq * E * 4 + 2 * tq * 4)                      # scratch
    def vmem_limit(nbytes):
        # generous headroom, but never above v7x's 64 MiB physical VMEM
        return int(min(max(2 * nbytes, 32 << 20), 64 << 20))

    # ------------------ kernel 1: LN1 + fused QKV ------------------
    const2 = lambda b, i: (0, 0)
    act_spec_q = lambda: pl.BlockSpec((pl.Squeezed(), tq, E),
                                      lambda b, i: (b, i, 0))
    qkv_cost = pl.CostEstimate(
        flops=2 * B * T * E * 3 * E + 10 * B * T * E,
        transcendentals=B * T,
        bytes_accessed=4 * B * T * E + 2 * E * 3 * E + 3 * 2 * B * T * E)

    q, k, v = pl.pallas_call(
        functools.partial(qkv_kernel, scale=1.0 / math.sqrt(E)),
        out_shape=[jax.ShapeDtypeStruct((B, T, E), bf)] * 3,
        grid=(B, nq),
        in_specs=[
            act_spec_q(),                       # x tile
            pl.BlockSpec((1, E), const2),       # ln1_w
            pl.BlockSpec((1, E), const2),       # ln1_b
            pl.BlockSpec((E, 3 * E), const2),   # wqkv (bf16, VMEM-resident)
            pl.BlockSpec((1, 3 * E), const2),   # bqkv (f32)
        ],
        out_specs=[act_spec_q(), act_spec_q(), act_spec_q()],
        compiler_params=pltpu.CompilerParams(
            dimension_semantics=("parallel", "parallel"),
            vmem_limit_bytes=vmem_limit(k1_bytes)),
        cost_estimate=qkv_cost,
    )(x, prep["ln1_w"], prep["ln1_b"], prep["wqkv"], prep["bqkv"])

    # ---- kernel 2: flash attn + out-proj + residual + LN2 + MLP + residual
    const3 = lambda b, qi, ki: (0, 0)

    def q_tile_spec():
        return pl.BlockSpec((pl.Squeezed(), tq, E),
                            lambda b, qi, ki: (b, qi, 0))

    def kv_tile_spec():
        # Clamp the KV block index to the causal diagonal: once ki passes the
        # diagonal for this query tile, the index map keeps returning the same
        # block, so Pallas skips the DMA for causally-dead tiles entirely.
        def idx(b, qi, ki):
            return (b, jnp.minimum(ki, (qi * tq + tq - 1) // tk), 0)
        return pl.BlockSpec((pl.Squeezed(), tk, E), idx)

    attn_cost = pl.CostEstimate(
        flops=B * (2 * T * T * E + 18 * T * E * E),          # causal ~ half QK/PV
        transcendentals=B * (T * T // 2 + T * H),
        bytes_accessed=(2 * 4 * B * T * E + 3 * 2 * B * T * E + 2 * 9 * E * E))

    out = pl.pallas_call(
        functools.partial(attn_mlp_kernel, tq=tq, tk=tk),
        out_shape=jax.ShapeDtypeStruct((B, T, E), f32),
        grid=(B, nq, nk),
        in_specs=[
            q_tile_spec(),                       # x (residual input)
            q_tile_spec(),                       # q (bf16, pre-scaled)
            kv_tile_spec(),                      # k (bf16, causally clamped)
            kv_tile_spec(),                      # v (bf16, causally clamped)
            pl.BlockSpec((E, E), const3),        # wo (bf16)
            pl.BlockSpec((1, E), const3),        # bo
            pl.BlockSpec((1, E), const3),        # ln2_w
            pl.BlockSpec((1, E), const3),        # ln2_b
            pl.BlockSpec((E, H), const3),        # w1 (bf16)
            pl.BlockSpec((1, H), const3),        # b1
            pl.BlockSpec((H, E), const3),        # w2 (bf16)
            pl.BlockSpec((1, E), const3),        # b2
        ],
        out_specs=q_tile_spec(),
        scratch_shapes=[
            pltpu.VMEM((tq, 1), f32),    # running max m
            pltpu.VMEM((tq, 1), f32),    # running sum l
            pltpu.VMEM((tq, E), f32),    # output accumulator
        ],
        compiler_params=pltpu.CompilerParams(
            dimension_semantics=("parallel", "parallel", "arbitrary"),
            vmem_limit_bytes=vmem_limit(k2_bytes)),
        cost_estimate=attn_cost,
    )(x, q, k, v,
      prep["wo"], prep["bo"], prep["ln2_w"], prep["ln2_b"],
      prep["w1"], prep["b1"], prep["w2"], prep["b2"])
    return out


# ---------------------------------------------------------------------------
# Deterministic parameter init (PyTorch-Linear-style uniform, LN = ones/zeros).
# ---------------------------------------------------------------------------
def init_params(key, E):
    H = 4 * E

    def lin(k, fan_in, shape):
        bound = 1.0 / math.sqrt(fan_in)
        return jax.random.uniform(k, shape, jnp.float32, -bound, bound)

    ks = jax.random.split(key, 12)
    return {
        "ln1_w": jnp.ones((1, E), jnp.float32),
        "ln1_b": jnp.zeros((1, E), jnp.float32),
        "ln2_w": jnp.ones((1, E), jnp.float32),
        "ln2_b": jnp.zeros((1, E), jnp.float32),
        "wq": lin(ks[0], E, (E, E)), "bq": lin(ks[1], E, (1, E)),
        "wk": lin(ks[2], E, (E, E)), "bk": lin(ks[3], E, (1, E)),
        "wv": lin(ks[4], E, (E, E)), "bv": lin(ks[5], E, (1, E)),
        "wo": lin(ks[6], E, (E, E)), "bo": lin(ks[7], E, (1, E)),
        "w1": lin(ks[8], E, (E, H)), "b1": lin(ks[9], E, (1, H)),
        "w2": lin(ks[10], H, (H, E)), "b2": lin(ks[11], H, (1, E)),
    }


# ---------------------------------------------------------------------------
# Pure-JAX f32 reference for correctness checking.
# ---------------------------------------------------------------------------
def ref_block(x, p):
    B, T, E = x.shape

    def ln(z, w, b):
        mu = z.mean(-1, keepdims=True)
        var = ((z - mu) ** 2).mean(-1, keepdims=True)
        return (z - mu) / jnp.sqrt(var + 1e-5) * w[0] + b[0]

    h = ln(x, p["ln1_w"], p["ln1_b"])
    q = h @ p["wq"] + p["bq"][0]
    k = h @ p["wk"] + p["bk"][0]
    v = h @ p["wv"] + p["bv"][0]
    scores = jnp.einsum("bte,bse->bts", q, k) / math.sqrt(E)
    mask = jnp.tril(jnp.ones((T, T), bool))
    scores = jnp.where(mask, scores, -jnp.inf)
    att = jax.nn.softmax(scores, axis=-1)
    a = jnp.einsum("bts,bse->bte", att, v) @ p["wo"] + p["bo"][0]
    x = x + a
    h2 = ln(x, p["ln2_w"], p["ln2_b"])
    m = jax.nn.gelu(h2 @ p["w1"] + p["b1"][0], approximate=True)
    return x + (m @ p["w2"] + p["b2"][0])


if __name__ == "__main__":
    # Lane-dense small shapes: E, 4E multiples of 128; T a multiple of TQ=TK=256
    # so nq=nk=2 exercises the masked / unmasked / skipped KV-tile branches.
    B, T, E = 2, 512, 128
    key = jax.random.PRNGKey(0)
    kx, kp = jax.random.split(key)

    x = jax.random.normal(kx, (B, T, E), dtype=jnp.float32)
    params = init_params(kp, E)
    prep = prepare_params(params)        # one-time weight fusion / bf16 cast

    out = jax.block_until_ready(transformer_block(x, prep, tq=256, tk=256))
    ref = ref_block(x, params)

    assert out.shape == (B, T, E)
    # Kernel uses bf16 MXU inputs with f32 accumulation; compare against the
    # pure-f32 reference with a correspondingly relaxed tolerance.
    max_err = float(jnp.max(jnp.abs(out - ref)))
    assert jnp.allclose(out, ref, atol=5e-2, rtol=5e-2), (
        f"mismatch vs reference (max abs err {max_err})")

    print("KERNEL_OK")
</pallas_src>

<mosaic_0001>
module attributes {stable_mosaic.version = 11 : i64} {
  func.func @qkv_kernel(%arg0: i32, %arg1: i32, %arg2: memref<1x256x128xf32, #tpu.memory_space<vmem>>, %arg3: memref<1x128xf32, #tpu.memory_space<vmem>>, %arg4: memref<1x128xf32, #tpu.memory_space<vmem>>, %arg5: memref<128x384xbf16, #tpu.memory_space<vmem>>, %arg6: memref<1x384xf32, #tpu.memory_space<vmem>>, %arg7: memref<1x256x128xbf16, #tpu.memory_space<vmem>>, %arg8: memref<1x256x128xbf16, #tpu.memory_space<vmem>>, %arg9: memref<1x256x128xbf16, #tpu.memory_space<vmem>>) attributes {dimension_semantics = [#tpu.dimension_semantics<parallel>, #tpu.dimension_semantics<parallel>], iteration_bounds = array<i64: 2, 2>, scalar_prefetch = 0 : i64, scratch_operands = 0 : i64, tpu.core_type = #tpu.core_type<tc>, window_params = [{transform_indices = @transform_0, window_bounds = array<i64: 1, 256, 128>}, {pipeline_mode = #tpu.pipeline_mode<synchronous>, transform_indices = @transform_1, window_bounds = array<i64: 1, 128>}, {pipeline_mode = #tpu.pipeline_mode<synchronous>, transform_indices = @transform_2, window_bounds = array<i64: 1, 128>}, {pipeline_mode = #tpu.pipeline_mode<synchronous>, transform_indices = @transform_3, window_bounds = array<i64: 128, 384>}, {pipeline_mode = #tpu.pipeline_mode<synchronous>, transform_indices = @transform_4, window_bounds = array<i64: 1, 384>}, {transform_indices = @transform_5, window_bounds = array<i64: 1, 256, 128>}, {transform_indices = @transform_6, window_bounds = array<i64: 1, 256, 128>}, {transform_indices = @transform_7, window_bounds = array<i64: 1, 256, 128>}]} {
    %c0 = arith.constant 0 : index
    %c0_0 = arith.constant 0 : index
    %c0_1 = arith.constant 0 : index
    %0 = vector.load %arg2[%c0, %c0_0, %c0_1] : memref<1x256x128xf32, #tpu.memory_space<vmem>>, vector<1x256x128xf32>
    %1 = vector.shape_cast %0 : vector<1x256x128xf32> to vector<256x128xf32>
    %cst = arith.constant dense<0.000000e+00> : vector<256xf32>
    %2 = vector.multi_reduction <add>, %1, %cst [1] : vector<256x128xf32> to vector<256xf32>
    %3 = vector.shape_cast %2 : vector<256xf32> to vector<256x1xf32>
    %cst_2 = arith.constant 1.280000e+02 : f32
    %4 = vector.broadcast %cst_2 : f32 to vector<256x1xf32>
    %5 = arith.divf %3, %4 : vector<256x1xf32>
    %6 = vector.broadcast %5 : vector<256x1xf32> to vector<256x128xf32>
    %7 = arith.subf %1, %6 : vector<256x128xf32>
    %8 = arith.mulf %7, %7 : vector<256x128xf32>
    %cst_3 = arith.constant dense<0.000000e+00> : vector<256xf32>
    %9 = vector.multi_reduction <add>, %8, %cst_3 [1] : vector<256x128xf32> to vector<256xf32>
    %10 = vector.shape_cast %9 : vector<256xf32> to vector<256x1xf32>
    %cst_4 = arith.constant 1.280000e+02 : f32
    %11 = vector.broadcast %cst_4 : f32 to vector<256x1xf32>
    %12 = arith.divf %10, %11 : vector<256x1xf32>
    %13 = vector.broadcast %5 : vector<256x1xf32> to vector<256x128xf32>
    %14 = arith.subf %1, %13 : vector<256x128xf32>
    %cst_5 = arith.constant 9.99999974E-6 : f32
    %15 = vector.broadcast %cst_5 : f32 to vector<256x1xf32>
    %16 = arith.addf %12, %15 : vector<256x1xf32>
    %17 = math.rsqrt %16 : vector<256x1xf32>
    %18 = vector.broadcast %17 : vector<256x1xf32> to vector<256x128xf32>
    %19 = arith.mulf %14, %18 : vector<256x128xf32>
    %c0_6 = arith.constant 0 : index
    %c0_7 = arith.constant 0 : index
    %20 = vector.load %arg3[%c0_6, %c0_7] : memref<1x128xf32, #tpu.memory_space<vmem>>, vector<1x128xf32>
    %21 = vector.broadcast %20 : vector<1x128xf32> to vector<256x128xf32>
    %22 = arith.mulf %19, %21 : vector<256x128xf32>
    %c0_8 = arith.constant 0 : index
    %c0_9 = arith.constant 0 : index
    %23 = vector.load %arg4[%c0_8, %c0_9] : memref<1x128xf32, #tpu.memory_space<vmem>>, vector<1x128xf32>
    %24 = vector.broadcast %23 : vector<1x128xf32> to vector<256x128xf32>
    %25 = arith.addf %22, %24 : vector<256x128xf32>
    %26 = arith.truncf %25 : vector<256x128xf32> to vector<256x128xbf16>
    %c0_10 = arith.constant 0 : index
    %c0_11 = arith.constant 0 : index
    %27 = vector.load %arg5[%c0_10, %c0_11] : memref<128x384xbf16, #tpu.memory_space<vmem>>, vector<128x384xbf16>
    %cst_12 = arith.constant dense<0.000000e+00> : vector<256x384xf32>
    %28 = tpu.matmul %26, %27, %cst_12 {dimension_numbers = #tpu.dot_dimension_numbers<[1], [0], [0], [1], [0, 0, 1, 1], [], []>} : vector<256x128xbf16>, vector<128x384xbf16>, vector<256x384xf32> -> vector<256x384xf32>
    %c0_13 = arith.constant 0 : index
    %c0_14 = arith.constant 0 : index
    %29 = vector.load %arg6[%c0_13, %c0_14] : memref<1x384xf32, #tpu.memory_space<vmem>>, vector<1x384xf32>
    %30 = vector.broadcast %29 : vector<1x384xf32> to vector<256x384xf32>
    %31 = arith.addf %28, %30 : vector<256x384xf32>
    %32 = vector.extract_strided_slice %31 {offsets = [0, 0], sizes = [256, 128], strides = [1, 1]} : vector<256x384xf32> to vector<256x128xf32>
    %cst_15 = arith.constant 0.0883883461 : f32
    %33 = vector.broadcast %cst_15 : f32 to vector<256x128xf32>
    %34 = arith.mulf %32, %33 : vector<256x128xf32>
    %35 = arith.truncf %34 : vector<256x128xf32> to vector<256x128xbf16>
    %c0_16 = arith.constant 0 : index
    %c0_17 = arith.constant 0 : index
    %c0_18 = arith.constant 0 : index
    %36 = vector.load %arg7[%c0_16, %c0_17, %c0_18] : memref<1x256x128xbf16, #tpu.memory_space<vmem>>, vector<1x256x128xbf16>
    %37 = vector.shape_cast %36 : vector<1x256x128xbf16> to vector<256x128xbf16>
    %38 = vector.shape_cast %35 : vector<256x128xbf16> to vector<1x256x128xbf16>
    tpu.vector_store %arg7[%c0_16, %c0_17, %c0_18], %38 {strides = array<i32>} : memref<1x256x128xbf16, #tpu.memory_space<vmem>>, vector<1x256x128xbf16>,
    %39 = vector.extract_strided_slice %31 {offsets = [0, 128], sizes = [256, 128], strides = [1, 1]} : vector<256x384xf32> to vector<256x128xf32>
    %40 = arith.truncf %39 : vector<256x128xf32> to vector<256x128xbf16>
    %c0_19 = arith.constant 0 : index
    %c0_20 = arith.constant 0 : index
    %c0_21 = arith.constant 0 : index
    %41 = vector.load %arg8[%c0_19, %c0_20, %c0_21] : memref<1x256x128xbf16, #tpu.memory_space<vmem>>, vector<1x256x128xbf16>
    %42 = vector.shape_cast %41 : vector<1x256x128xbf16> to vector<256x128xbf16>
    %43 = vector.shape_cast %40 : vector<256x128xbf16> to vector<1x256x128xbf16>
    tpu.vector_store %arg8[%c0_19, %c0_20, %c0_21], %43 {strides = array<i32>} : memref<1x256x128xbf16, #tpu.memory_space<vmem>>, vector<1x256x128xbf16>,
    %44 = vector.extract_strided_slice %31 {offsets = [0, 256], sizes = [256, 128], strides = [1, 1]} : vector<256x384xf32> to vector<256x128xf32>
    %45 = arith.truncf %44 : vector<256x128xf32> to vector<256x128xbf16>
    %c0_22 = arith.constant 0 : index
    %c0_23 = arith.constant 0 : index
    %c0_24 = arith.constant 0 : index
    %46 = vector.load %arg9[%c0_22, %c0_23, %c0_24] : memref<1x256x128xbf16, #tpu.memory_space<vmem>>, vector<1x256x128xbf16>
    %47 = vector.shape_cast %46 : vector<1x256x128xbf16> to vector<256x128xbf16>
    %48 = vector.shape_cast %45 : vector<256x128xbf16> to vector<1x256x128xbf16>
    tpu.vector_store %arg9[%c0_22, %c0_23, %c0_24], %48 {strides = array<i32>} : memref<1x256x128xbf16, #tpu.memory_space<vmem>>, vector<1x256x128xbf16>,
    return
  }
  func.func @transform_0(%arg0: i32, %arg1: i32) -> (i32, i32, i32) {
    %c0_i32 = arith.constant 0 : i32
    %c0_i32_0 = arith.constant 0 : i32
    return %arg0, %arg1, %c0_i32 : i32, i32, i32
  }
  func.func @transform_1(%arg0: i32, %arg1: i32) -> (i32, i32) {
    %c0_i32 = arith.constant 0 : i32
    %c0_i32_0 = arith.constant 0 : i32
    %c0_i32_1 = arith.constant 0 : i32
    return %c0_i32, %c0_i32_0 : i32, i32
  }
  func.func @transform_2(%arg0: i32, %arg1: i32) -> (i32, i32) {
    %c0_i32 = arith.constant 0 : i32
    %c0_i32_0 = arith.constant 0 : i32
    %c0_i32_1 = arith.constant 0 : i32
    return %c0_i32, %c0_i32_0 : i32, i32
  }
  func.func @transform_3(%arg0: i32, %arg1: i32) -> (i32, i32) {
    %c0_i32 = arith.constant 0 : i32
    %c0_i32_0 = arith.constant 0 : i32
    %c0_i32_1 = arith.constant 0 : i32
    return %c0_i32, %c0_i32_0 : i32, i32
  }
  func.func @transform_4(%arg0: i32, %arg1: i32) -> (i32, i32) {
    %c0_i32 = arith.constant 0 : i32
    %c0_i32_0 = arith.constant 0 : i32
    %c0_i32_1 = arith.constant 0 : i32
    return %c0_i32, %c0_i32_0 : i32, i32
  }
  func.func @transform_5(%arg0: i32, %arg1: i32) -> (i32, i32, i32) {
    %c0_i32 = arith.constant 0 : i32
    %c0_i32_0 = arith.constant 0 : i32
    return %arg0, %arg1, %c0_i32 : i32, i32, i32
  }
  func.func @transform_6(%arg0: i32, %arg1: i32) -> (i32, i32, i32) {
    %c0_i32 = arith.constant 0 : i32
    %c0_i32_0 = arith.constant 0 : i32
    return %arg0, %arg1, %c0_i32 : i32, i32, i32
  }
  func.func @transform_7(%arg0: i32, %arg1: i32) -> (i32, i32, i32) {
    %c0_i32 = arith.constant 0 : i32
    %c0_i32_0 = arith.constant 0 : i32
    return %arg0, %arg1, %c0_i32 : i32, i32, i32
  }
}

</mosaic_0001>

<llo_original>
// kernel: tpu_custom_call.1
$region0: #{tpu_custom_call.1}
  #allocation0 [shape = 'u32[]', space=smem, size = 0x4, offset = 0x4, fixed_abs, tag = 'smem constant byte address 0x4 - core index']
  #allocation1 [shape = 'u32[144,128]{1,0:T(1,128)}', space=vmem, size = 0x12000, scoped, tag = 'internal scratch']
  %s0 = inlined_call_operand.hbm [shape: f32[2,512,128], index: 0, kind: input, shape index: {}]
  %s1 = inlined_call_operand.vmem [shape: f32[1,128], index: 1, kind: input, shape index: {}]
  %s2 = inlined_call_operand.vmem [shape: f32[1,128], index: 2, kind: input, shape index: {}]
  %s3 = inlined_call_operand.hbm [shape: bf16[128,384], index: 3, kind: input, shape index: {}]
  %s4 = inlined_call_operand.vmem [shape: f32[1,384], index: 4, kind: input, shape index: {}]
  %s5 = inlined_call_operand.hbm [shape: bf16[2,512,128], index: 5, kind: output, shape index: {0}]
  %s6 = inlined_call_operand.hbm [shape: bf16[2,512,128], index: 6, kind: output, shape index: {1}]
  %s7 = inlined_call_operand.hbm [shape: bf16[2,512,128], index: 7, kind: output, shape index: {2}]
  %8 = xla_tuple %s5, %s6, %s7
  %s9 = sld [smem:[#allocation0]]
  $region77: #{tpu_custom_call.1} parent=0
    _
  %s11 = ssub.s32 1, %s9
  %s12 = scalar_select 0, %s11, %s9
  $region1: #{tpu_custom_call.1} parent=0
    #allocation2 [shape = 'u8[262144]{0}', space=vmem, size = 0x40000, scoped, tag = 'input window, operand 0']
    #allocation3 [shape = 's32[2]{0}', space=sflag, size = 0x8, scoped, tag = 'scoped memory for tpu_custom_call.1']
    #allocation4 [shape = 's32[2]{0}', space=sflag, size = 0x8, scoped, tag = 'scoped memory for tpu_custom_call.1']
    #allocation5 [shape = 'u8[98304]{0}', space=vmem, size = 0x18000, scoped, tag = 'input window, operand 3, single buffered']
    #allocation6 [shape = 's32[1]{0}', space=sflag, size = 0x4, scoped, tag = 'scoped memory for tpu_custom_call.1']
    #allocation7 [shape = 'u8[131072]{0}', space=vmem, size = 0x20000, scoped, tag = 'output window, operand 0']
    #allocation8 [shape = 'u8[131072]{0}', space=vmem, size = 0x20000, scoped, tag = 'output window, operand 1']
    #allocation9 [shape = 's32[2]{0}', space=sflag, size = 0x8, scoped, tag = 'scoped memory for tpu_custom_call.1']
    #allocation10 [shape = 'u8[131072]{0}', space=vmem, size = 0x20000, scoped, tag = 'output window, operand 2']
    %13 = vsyncpa [#allocation3], 0
    %s14 = scalar_lea.sflag [#allocation3], 1
    %15 = vsyncpa %s14, 0
    %16 = vsyncpa [#allocation6], 0
    %17 = vsyncpa [#allocation4], 0
    %s18 = scalar_lea.sflag [#allocation4], 1
    %19 = vsyncpa %s18, 0
    %20 = vsyncpa [#allocation9], 0
    %s21 = scalar_lea.sflag [#allocation9], 1
    %22 = vsyncpa %s21, 0
    loop: start=0, step=1, limit=6
    $region2: #{tpu_custom_call.1} parent=1 // loop_pre_header
      _
    $region3: #{tpu_custom_call.1} parent=1 // loop_header
      %s24 = sphi 0, %s28
      %p25 = scmp.ge.s32.totalorder %s24, 6
      %s31 = sphi 0, %s43
      %s32 = sphi 0, %s39
      %s33 = sphi 0, %s31
      %s34 = sphi 0, %s32
      %s35 = sphi 0, %s33
      %s36 = sphi 0, %s34
      %s48 = sphi 0, %s50
      %s51 = sphi 0, %s48
      %s52 = sphi 0, %s51
      %s68 = sphi 0, %s52
      %s72 = sphi 0, %s72
      %s74 = sphi 0, %s72
      %s75 = sphi 0, %s74
      %s89 = sphi 0, %s75
      %s93 = sphi 0, %s93
      %s95 = sphi 0, %s93
      %s96 = sphi 0, %s95
      %s110 = sphi 0, %s96
      %s114 = sphi 0, %s114
      %s116 = sphi 0, %s114
      %s117 = sphi 0, %s116
      %s131 = sphi 0, %s117
      %s135 = sphi 0, %s135
      %s137 = sphi 0, %s135
      %s138 = sphi 0, %s137
      %s152 = sphi 0, %s138
      %s160 = sphi 0, %s162
      %s163 = sphi 0, %s160
      %s164 = sphi 0, %s163
      %s180 = sphi 0, %s164
      %s188 = sphi 0, %s190
      %s191 = sphi 0, %s188
      %s192 = sphi 0, %s191
      %s208 = sphi 0, %s192
      %s216 = sphi 0, %s218
      %s219 = sphi 0, %s216
      %s220 = sphi 0, %s219
      %s236 = sphi 0, %s220
    $region4: #{tpu_custom_call.1} parent=1 // loop_header_branch
      %27 = sbr.rel (%p25) target = $region8
    $region5: #{tpu_custom_call.1} parent=1 // loop_body
      %s29 = ssub.s32 %s24, 1
      %s30 = ssub.s32 %s24, 2
      %s37 = sadd.s32 1, %s32
      %p38 = scmp.ge.s32.totalorder %s37, 2
      %s39 = scalar_select %p38, 0, %s37
      %s40 = sadd.s32 1, %s31
      %s41 = scalar_select %p38, %s40, %s31
      %p42 = scmp.ge.s32.totalorder %s41, 2
      %s43 = scalar_select %p42, 0, %s41
      %s44 = ssub.s32 %s31, %s43
      %s45 = ssub.s32 %s32, %s39
      %s46 = sor.u32 %s44, %s45
      %p47 = scmp.eq.s32.totalorder %s46, 0
      %s49 = sadd.s32 %s48, 1
      %s50 = scalar_select %p47, %s48, %s49
      %p53 = pneg %p47
      %p54 = scmp.eq.s32.totalorder %s24, 3
      %p55 = por %p53, %p54
      %p56 = scmp.ne.s32.totalorder %s48, %s51
      %p57 = scmp.eq.s32.totalorder %s24, 0
      %p58 = por %p56, %p57
      %p59 = scmp.ne.s32.totalorder %s48, %s51
      %p60 = scmp.eq.s32.totalorder %s29, 3
      %p61 = por %p59, %p60
      %p62 = scmp.ne.s32.totalorder %s51, %s52
      %p63 = scmp.eq.s32.totalorder %s29, 0
      %p64 = por %p62, %p63
      %p65 = scmp.ne.s32.totalorder %s51, %s52
      %p66 = scmp.eq.s32.totalorder %s30, 3
      %p67 = por %p65, %p66
      %p69 = scmp.ne.s32.totalorder %s52, %s68
      %p70 = scmp.eq.s32.totalorder %s30, 0
      %p71 = por %p69, %p70
      %s73 = sadd.s32 %s72, 1
      %p76 = scmp.eq.s32.totalorder %s24, 3
      %p77 = scmp.ne.s32.totalorder %s72, %s74
      %p78 = scmp.eq.s32.totalorder %s24, 0
      %p79 = por %p77, %p78
      %p80 = scmp.ne.s32.totalorder %s72, %s74
      %p81 = scmp.eq.s32.totalorder %s29, 3
      %p82 = por %p80, %p81
      %p83 = scmp.ne.s32.totalorder %s74, %s75
      %p84 = scmp.eq.s32.totalorder %s29, 0
      %p85 = por %p83, %p84
      %p86 = scmp.ne.s32.totalorder %s74, %s75
      %p87 = scmp.eq.s32.totalorder %s30, 3
      %p88 = por %p86, %p87
      %p90 = scmp.ne.s32.totalorder %s75, %s89
      %p91 = scmp.eq.s32.totalorder %s30, 0
      %p92 = por %p90, %p91
      %s94 = sadd.s32 %s93, 1
      %p97 = scmp.eq.s32.totalorder %s24, 3
      %p98 = scmp.ne.s32.totalorder %s93, %s95
      %p99 = scmp.eq.s32.totalorder %s24, 0
      %p100 = por %p98, %p99
      %p101 = scmp.ne.s32.totalorder %s93, %s95
      %p102 = scmp.eq.s32.totalorder %s29, 3
      %p103 = por %p101, %p102
      %p104 = scmp.ne.s32.totalorder %s95, %s96
      %p105 = scmp.eq.s32.totalorder %s29, 0
      %p106 = por %p104, %p105
      %p107 = scmp.ne.s32.totalorder %s95, %s96
      %p108 = scmp.eq.s32.totalorder %s30, 3
      %p109 = por %p107, %p108
      %p111 = scmp.ne.s32.totalorder %s96, %s110
      %p112 = scmp.eq.s32.totalorder %s30, 0
      %p113 = por %p111, %p112
      %s115 = sadd.s32 %s114, 1
      %p118 = scmp.eq.s32.totalorder %s24, 3
      %p119 = scmp.ne.s32.totalorder %s114, %s116
      %p120 = scmp.eq.s32.totalorder %s24, 0
      %p121 = por %p119, %p120
      %p122 = scmp.ne.s32.totalorder %s114, %s116
      %p123 = scmp.eq.s32.totalorder %s29, 3
      %p124 = por %p122, %p123
      %p125 = scmp.ne.s32.totalorder %s116, %s117
      %p126 = scmp.eq.s32.totalorder %s29, 0
      %p127 = por %p125, %p126
      %p128 = scmp.ne.s32.totalorder %s116, %s117
      %p129 = scmp.eq.s32.totalorder %s30, 3
      %p130 = por %p128, %p129
      %p132 = scmp.ne.s32.totalorder %s117, %s131
      %p133 = scmp.eq.s32.totalorder %s30, 0
      %p134 = por %p132, %p133
      %s136 = sadd.s32 %s135, 1
      %p139 = scmp.eq.s32.totalorder %s24, 3
      %p140 = scmp.ne.s32.totalorder %s135, %s137
      %p141 = scmp.eq.s32.totalorder %s24, 0
      %p142 = por %p140, %p141
      %p143 = scmp.ne.s32.totalorder %s135, %s137
      %p144 = scmp.eq.s32.totalorder %s29, 3
      %p145 = por %p143, %p144
      %p146 = scmp.ne.s32.totalorder %s137, %s138
      %p147 = scmp.eq.s32.totalorder %s29, 0
      %p148 = por %p146, %p147
      %p149 = scmp.ne.s32.totalorder %s137, %s138
      %p150 = scmp.eq.s32.totalorder %s30, 3
      %p151 = por %p149, %p150
      %p153 = scmp.ne.s32.totalorder %s138, %s152
      %p154 = scmp.eq.s32.totalorder %s30, 0
      %p155 = por %p153, %p154
      %s156 = ssub.s32 %s31, %s43
      %s157 = ssub.s32 %s32, %s39
      %s158 = sor.u32 %s156, %s157
      %p159 = scmp.eq.s32.totalorder %s158, 0
      %s161 = sadd.s32 %s160, 1
      %s162 = scalar_select %p159, %s160, %s161
      %p165 = pneg %p159
      %p166 = scmp.eq.s32.totalorder %s24, 3
      %p167 = por %p165, %p166
      %p168 = scmp.ne.s32.totalorder %s160, %s163
      %p169 = scmp.eq.s32.totalorder %s24, 0
      %p170 = por %p168, %p169
      %p171 = scmp.ne.s32.totalorder %s160, %s163
      %p172 = scmp.eq.s32.totalorder %s29, 3
      %p173 = por %p171, %p172
      %p174 = scmp.ne.s32.totalorder %s163, %s164
      %p175 = scmp.eq.s32.totalorder %s29, 0
      %p176 = por %p174, %p175
      %p177 = scmp.ne.s32.totalorder %s163, %s164
      %p178 = scmp.eq.s32.totalorder %s30, 3
      %p179 = por %p177, %p178
      %p181 = scmp.ne.s32.totalorder %s164, %s180
      %p182 = scmp.eq.s32.totalorder %s30, 0
      %p183 = por %p181, %p182
      %s184 = ssub.s32 %s31, %s43
      %s185 = ssub.s32 %s32, %s39
      %s186 = sor.u32 %s184, %s185
      %p187 = scmp.eq.s32.totalorder %s186, 0
      %s189 = sadd.s32 %s188, 1
      %s190 = scalar_select %p187, %s188, %s189
      %p193 = pneg %p187
      %p194 = scmp.eq.s32.totalorder %s24, 3
      %p195 = por %p193, %p194
      %p196 = scmp.ne.s32.totalorder %s188, %s191
      %p197 = scmp.eq.s32.totalorder %s24, 0
      %p198 = por %p196, %p197
      %p199 = scmp.ne.s32.totalorder %s188, %s191
      %p200 = scmp.eq.s32.totalorder %s29, 3
      %p201 = por %p199, %p200
      %p202 = scmp.ne.s32.totalorder %s191, %s192
      %p203 = scmp.eq.s32.totalorder %s29, 0
      %p204 = por %p202, %p203
      %p205 = scmp.ne.s32.totalorder %s191, %s192
      %p206 = scmp.eq.s32.totalorder %s30, 3
      %p207 = por %p205, %p206
      %p209 = scmp.ne.s32.totalorder %s192, %s208
      %p210 = scmp.eq.s32.totalorder %s30, 0
      %p211 = por %p209, %p210
      %s212 = ssub.s32 %s31, %s43
      %s213 = ssub.s32 %s32, %s39
      %s214 = sor.u32 %s212, %s213
      %p215 = scmp.eq.s32.totalorder %s214, 0
      %s217 = sadd.s32 %s216, 1
      %s218 = scalar_select %p215, %s216, %s217
      %p221 = pneg %p215
      %p222 = scmp.eq.s32.totalorder %s24, 3
      %p223 = por %p221, %p222
      %p224 = scmp.ne.s32.totalorder %s216, %s219
      %p225 = scmp.eq.s32.totalorder %s24, 0
      %p226 = por %p224, %p225
      %p227 = scmp.ne.s32.totalorder %s216, %s219
      %p228 = scmp.eq.s32.totalorder %s29, 3
      %p229 = por %p227, %p228
      %p230 = scmp.ne.s32.totalorder %s219, %s220
      %p231 = scmp.eq.s32.totalorder %s29, 0
      %p232 = por %p230, %p231
      %p233 = scmp.ne.s32.totalorder %s219, %s220
      %p234 = scmp.eq.s32.totalorder %s30, 3
      %p235 = por %p233, %p234
      %p237 = scmp.ne.s32.totalorder %s220, %s236
      %p238 = scmp.eq.s32.totalorder %s30, 0
      %p239 = por %p237, %p238
      %p240 = scmp.le.s32.totalorder 1, %s24
      %p241 = scmp.lt.s32.totalorder %s24, 5
      %p242 = pnand %p240, %p241
      %p243 = pneg %p242
      // Predicated region
      $region9: #{tpu_custom_call.1} parent=5 // pred_check
        _
      $region10: #{tpu_custom_call.1} parent=5 // pred_check_branch
        %245 = sbr.rel (%p242) target = $region12
      $region11: #{tpu_custom_call.1} parent=5 // pred_region
        %s246 = ssub.s32 %s24, 1
        // Predicated region
        $region13: #{tpu_custom_call.1} parent=11 // pred_check
          %p247 = pneg %p85
        $region14: #{tpu_custom_call.1} parent=11 // pred_check_branch
          %249 = sbr.rel (%p247) target = $region16
        $region15: #{tpu_custom_call.1} parent=11 // pred_region
          _
        $region16: #{tpu_custom_call.1} parent=11 // pred_fallthru
          _
        // Predicated region
        $region17: #{tpu_custom_call.1} parent=11 // pred_check
          %p250 = pneg %p106
        $region18: #{tpu_custom_call.1} parent=11 // pred_check_branch
          %252 = sbr.rel (%p250) target = $region20
        $region19: #{tpu_custom_call.1} parent=11 // pred_region
          _
        $region20: #{tpu_custom_call.1} parent=11 // pred_fallthru
          _
        // Predicated region
        $region21: #{tpu_custom_call.1} parent=11 // pred_check
          %p253 = pneg %p127
        $region22: #{tpu_custom_call.1} parent=11 // pred_check_branch
          %255 = sbr.rel (%p253) target = $region24
        $region23: #{tpu_custom_call.1} parent=11 // pred_region
          %s257 = ssub.s32 3072, 3072
          %258 = vsyncadd [#allocation6], %s257
          %s259 = sshll.u32 [#allocation5], 4
          %s260 = int_to_ptr.vmem [resolvable:$true] %s259
          %265 = dma.hbm_to_vmem [thread:$0]  %s3, 3072, %s260, [#allocation6], 192, 192, 12
        $region24: #{tpu_custom_call.1} parent=11 // pred_fallthru
          _
        // Predicated region
        $region25: #{tpu_custom_call.1} parent=11 // pred_check
          %p266 = pneg %p148
        $region26: #{tpu_custom_call.1} parent=11 // pred_check_branch
          %268 = sbr.rel (%p266) target = $region28
        $region27: #{tpu_custom_call.1} parent=11 // pred_region
          _
        $region28: #{tpu_custom_call.1} parent=11 // pred_fallthru
          _
      $region12: #{tpu_custom_call.1} parent=5 // pred_fallthru
        _
      %p269 = scmp.lt.s32.totalorder %s24, 4
      // Predicated region
      $region29: #{tpu_custom_call.1} parent=5 // pred_check
        %p270 = pneg %p269
      $region30: #{tpu_custom_call.1} parent=5 // pred_check_branch
        %272 = sbr.rel (%p270) target = $region32
      $region31: #{tpu_custom_call.1} parent=5 // pred_region
        // Predicated region
        $region33: #{tpu_custom_call.1} parent=31 // pred_check
          %p273 = pneg %p58
        $region34: #{tpu_custom_call.1} parent=31 // pred_check_branch
          %275 = sbr.rel (%p273) target = $region36
        $region35: #{tpu_custom_call.1} parent=31 // pred_region
          %s276 = sand.u32 %s48, 1
          %s277 = scalar_lea.sflag [#allocation3], %s276
          %s278 = sand.u32 %s48, 1
          %s279 = smul.addr %s278, 256
          %s280 = scalar_lea.vmem [#allocation2], %s279
          %s281 = smul.u32 32, %s32
          %s283 = ssub.s32 4096, 4096
          %284 = vsyncadd %s277, %s283
          %s285 = smul.addr %s31, 64
          %s286 = sadd.s32 %s281, %s285
          %s287 = smul.addr %s286, 128
          %s288 = scalar_lea.hbm %s0, %s287
          %s289 = sshll.u32 %s280, 4
          %s290 = int_to_ptr.vmem [resolvable:$true] %s289
          %295 = dma.hbm_to_vmem [thread:$0]  %s288, 4096, %s290, %s277, 128, 128, 8
        $region36: #{tpu_custom_call.1} parent=31 // pred_fallthru
          _
      $region32: #{tpu_custom_call.1} parent=5 // pred_fallthru
        _
      %p296 = scmp.le.s32.totalorder 1, %s24
      %p297 = scmp.lt.s32.totalorder %s24, 5
      %p298 = pnand %p296, %p297
      %p299 = pneg %p298
      // Predicated region
      $region37: #{tpu_custom_call.1} parent=5 // pred_check
        _
      $region38: #{tpu_custom_call.1} parent=5 // pred_check_branch
        %301 = sbr.rel (%p298) target = $region40
      $region39: #{tpu_custom_call.1} parent=5 // pred_region
        %s302 = ssub.s32 %s24, 1
        %s303 = sand.u32 %s51, 1
        %s304 = scalar_lea.sflag [#allocation3], %s303
        %s305 = sand.u32 %s51, 1
        %s306 = smul.addr %s305, 256
        %s307 = scalar_lea.vmem [#allocation2], %s306
        // Predicated region
        $region41: #{tpu_custom_call.1} parent=39 // pred_check
          %p308 = pneg %p64
        $region42: #{tpu_custom_call.1} parent=39 // pred_check_branch
          %310 = sbr.rel (%p308) target = $region44
        $region43: #{tpu_custom_call.1} parent=39 // pred_region
          %311 = dma.done %s304, 4096
        $region44: #{tpu_custom_call.1} parent=39 // pred_fallthru
          _
        // Predicated region
        $region45: #{tpu_custom_call.1} parent=39 // pred_check
          %p312 = pneg %p127
        $region46: #{tpu_custom_call.1} parent=39 // pred_check_branch
          %314 = sbr.rel (%p312) target = $region48
        $region47: #{tpu_custom_call.1} parent=39 // pred_region
          %315 = dma.done [#allocation6], 3072
        $region48: #{tpu_custom_call.1} parent=39 // pred_fallthru
          _
        %s316 = sand.u32 %s51, 1
        %s317 = scalar_lea.sflag [#allocation3], %s316
        %s318 = sand.u32 %s51, 1
        %s319 = smul.addr %s318, 256
        %s320 = scalar_lea.vmem [#allocation2], %s319
        %p321 = pneg %p64
        %p322 = pneg %p61
        %p323 = pneg %p85
        %p324 = pneg %p82
        %p325 = pneg %p106
        %p326 = pneg %p103
        %p327 = pneg %p127
        %p328 = pneg %p124
        %p329 = pneg %p148
        %p330 = pneg %p145
        %p331 = pneg %p176
        %p332 = pneg %p173
        %s333 = sand.u32 %s163, 1
        %s334 = scalar_lea.sflag [#allocation4], %s333
        %s335 = sand.u32 %s163, 1
        %s336 = smul.addr %s335, 128
        %s337 = scalar_lea.vmem [#allocation7], %s336
        %p338 = pneg %p204
        %p339 = pneg %p201
        %s340 = sand.u32 %s29, 1
        %s341 = scalar_lea.sflag [#allocation9], %s340
        %s342 = sand.u32 %s191, 1
        %s343 = smul.addr %s342, 128
        %s344 = scalar_lea.vmem [#allocation8], %s343
        %p345 = pneg %p232
        %p346 = pneg %p229
        %s347 = sand.u32 %s29, 1
        %s348 = scalar_lea.sflag [#allocation9], %s347
        %s349 = sand.u32 %s219, 1
        %s350 = smul.addr %s349, 128
        %s351 = scalar_lea.vmem [#allocation10], %s350
        %s352 = smul.u32 32, %s34
        %s353 = smul.u32 32, %s34
        %s354 = smul.u32 32, %s34
        %s355 = smul.u32 32, %s34
        %v357 = vld [vmem:[%s307] sm:$0xff]
        %v358 = vld [vmem:[%s307 + $0x8] sm:$0xff]
        %v359 = vld [vmem:[%s307 + $0x10] sm:$0xff]
        %v360 = vld [vmem:[%s307 + $0x18] sm:$0xff]
        %v361 = vld [vmem:[%s307 + $0x20] sm:$0xff]
        %v362 = vld [vmem:[%s307 + $0x28] sm:$0xff]
        %v363 = vld [vmem:[%s307 + $0x30] sm:$0xff]
        %v364 = vld [vmem:[%s307 + $0x38] sm:$0xff]
        %v365 = vld [vmem:[%s307 + $0x40] sm:$0xff]
        %v366 = vld [vmem:[%s307 + $0x48] sm:$0xff]
        %v367 = vld [vmem:[%s307 + $0x50] sm:$0xff]
        %v368 = vld [vmem:[%s307 + $0x58] sm:$0xff]
        %v369 = vld [vmem:[%s307 + $0x60] sm:$0xff]
        %v370 = vld [vmem:[%s307 + $0x68] sm:$0xff]
        %v371 = vld [vmem:[%s307 + $0x70] sm:$0xff]
        %v372 = vld [vmem:[%s307 + $0x78] sm:$0xff]
        %v373 = vld [vmem:[%s307 + $0x80] sm:$0xff]
        %v374 = vld [vmem:[%s307 + $0x88] sm:$0xff]
        %v375 = vld [vmem:[%s307 + $0x90] sm:$0xff]
        %v376 = vld [vmem:[%s307 + $0x98] sm:$0xff]
        %v377 = vld [vmem:[%s307 + $0xa0] sm:$0xff]
        %v378 = vld [vmem:[%s307 + $0xa8] sm:$0xff]
        %v379 = vld [vmem:[%s307 + $0xb0] sm:$0xff]
        %v380 = vld [vmem:[%s307 + $0xb8] sm:$0xff]
        %v381 = vld [vmem:[%s307 + $0xc0] sm:$0xff]
        %v382 = vld [vmem:[%s307 + $0xc8] sm:$0xff]
        %v383 = vld [vmem:[%s307 + $0xd0] sm:$0xff]
        %v384 = vld [vmem:[%s307 + $0xd8] sm:$0xff]
        %v385 = vld [vmem:[%s307 + $0xe0] sm:$0xff]
        %v386 = vld [vmem:[%s307 + $0xe8] sm:$0xff]
        %v387 = vld [vmem:[%s307 + $0xf0] sm:$0xff]
        %v388 = vld [vmem:[%s307 + $0xf8] sm:$0xff]
        %389 = vadd.xlane.f32.xlu0 %v357
        %v390 = vpop.xlane.xlu0 %389
        %391 = vadd.xlane.f32.xlu0 %v358
        %v392 = vpop.xlane.xlu0 %391
        %393 = vadd.xlane.f32.xlu0 %v359
        %v394 = vpop.xlane.xlu0 %393
        %395 = vadd.xlane.f32.xlu0 %v360
        %v396 = vpop.xlane.xlu0 %395
        %397 = vadd.xlane.f32.xlu0 %v361
        %v398 = vpop.xlane.xlu0 %397
        %399 = vadd.xlane.f32.xlu0 %v362
        %v400 = vpop.xlane.xlu0 %399
        %401 = vadd.xlane.f32.xlu0 %v363
        %v402 = vpop.xlane.xlu0 %401
        %403 = vadd.xlane.f32.xlu0 %v364
        %v404 = vpop.xlane.xlu0 %403
        %405 = vadd.xlane.f32.xlu0 %v365
        %v406 = vpop.xlane.xlu0 %405
        %407 = vadd.xlane.f32.xlu0 %v366
        %v408 = vpop.xlane.xlu0 %407
        %409 = vadd.xlane.f32.xlu0 %v367
        %v410 = vpop.xlane.xlu0 %409
        %411 = vadd.xlane.f32.xlu0 %v368
        %v412 = vpop.xlane.xlu0 %411
        %413 = vadd.xlane.f32.xlu0 %v369
        %v414 = vpop.xlane.xlu0 %413
        %415 = vadd.xlane.f32.xlu0 %v370
        %v416 = vpop.xlane.xlu0 %415
        %417 = vadd.xlane.f32.xlu0 %v371
        %v418 = vpop.xlane.xlu0 %417
        %419 = vadd.xlane.f32.xlu0 %v372
        %v420 = vpop.xlane.xlu0 %419
        %421 = vadd.xlane.f32.xlu0 %v373
        %v422 = vpop.xlane.xlu0 %421
        %423 = vadd.xlane.f32.xlu0 %v374
        %v424 = vpop.xlane.xlu0 %423
        %425 = vadd.xlane.f32.xlu0 %v375
        %v426 = vpop.xlane.xlu0 %425
        %427 = vadd.xlane.f32.xlu0 %v376
        %v428 = vpop.xlane.xlu0 %427
        %429 = vadd.xlane.f32.xlu0 %v377
        %v430 = vpop.xlane.xlu0 %429
        %431 = vadd.xlane.f32.xlu0 %v378
        %v432 = vpop.xlane.xlu0 %431
        %433 = vadd.xlane.f32.xlu0 %v379
        %v434 = vpop.xlane.xlu0 %433
        %435 = vadd.xlane.f32.xlu0 %v380
        %v436 = vpop.xlane.xlu0 %435
        %437 = vadd.xlane.f32.xlu0 %v381
        %v438 = vpop.xlane.xlu0 %437
        %439 = vadd.xlane.f32.xlu0 %v382
        %v440 = vpop.xlane.xlu0 %439
        %441 = vadd.xlane.f32.xlu0 %v383
        %v442 = vpop.xlane.xlu0 %441
        %443 = vadd.xlane.f32.xlu0 %v384
        %v444 = vpop.xlane.xlu0 %443
        %445 = vadd.xlane.f32.xlu0 %v385
        %v446 = vpop.xlane.xlu0 %445
        %447 = vadd.xlane.f32.xlu0 %v386
        %v448 = vpop.xlane.xlu0 %447
        %449 = vadd.xlane.f32.xlu0 %v387
        %v450 = vpop.xlane.xlu0 %449
        %451 = vadd.xlane.f32.xlu0 %v388
        %v452 = vpop.xlane.xlu0 %451
        %v453 = vrcp.pop 128.0
        %v454 = vmul.f32 %v390, %v453
        %v455 = vmul.f32 %v392, %v453
        %v456 = vmul.f32 %v394, %v453
        %v457 = vmul.f32 %v396, %v453
        %v458 = vmul.f32 %v398, %v453
        %v459 = vmul.f32 %v400, %v453
        %v460 = vmul.f32 %v402, %v453
        %v461 = vmul.f32 %v404, %v453
        %v462 = vmul.f32 %v406, %v453
        %v463 = vmul.f32 %v408, %v453
        %v464 = vmul.f32 %v410, %v453
        %v465 = vmul.f32 %v412, %v453
        %v466 = vmul.f32 %v414, %v453
        %v467 = vmul.f32 %v416, %v453
        %v468 = vmul.f32 %v418, %v453
        %v469 = vmul.f32 %v420, %v453
        %v470 = vmul.f32 %v422, %v453
        %v471 = vmul.f32 %v424, %v453
        %v472 = vmul.f32 %v426, %v453
        %v473 = vmul.f32 %v428, %v453
        %v474 = vmul.f32 %v430, %v453
        %v475 = vmul.f32 %v432, %v453
        %v476 = vmul.f32 %v434, %v453
        %v477 = vmul.f32 %v436, %v453
        %v478 = vmul.f32 %v438, %v453
        %v479 = vmul.f32 %v440, %v453
        %v480 = vmul.f32 %v442, %v453
        %v481 = vmul.f32 %v444, %v453
        %v482 = vmul.f32 %v446, %v453
        %v483 = vmul.f32 %v448, %v453
        %v484 = vmul.f32 %v450, %v453
        %v485 = vmul.f32 %v452, %v453
        %v486 = vsub.f32 %v357, %v454
        %v487 = vsub.f32 %v358, %v455
        %v488 = vsub.f32 %v359, %v456
        %v489 = vsub.f32 %v360, %v457
        %v490 = vsub.f32 %v361, %v458
        %v491 = vsub.f32 %v362, %v459
        %v492 = vsub.f32 %v363, %v460
        %v493 = vsub.f32 %v364, %v461
        %v494 = vsub.f32 %v365, %v462
        %v495 = vsub.f32 %v366, %v463
        %v496 = vsub.f32 %v367, %v464
        %v497 = vsub.f32 %v368, %v465
        %v498 = vsub.f32 %v369, %v466
        %v499 = vsub.f32 %v370, %v467
        %v500 = vsub.f32 %v371, %v468
        %v501 = vsub.f32 %v372, %v469
        %v502 = vsub.f32 %v373, %v470
        %v503 = vsub.f32 %v374, %v471
        %v504 = vsub.f32 %v375, %v472
        %v505 = vsub.f32 %v376, %v473
        %v506 = vsub.f32 %v377, %v474
        %v507 = vsub.f32 %v378, %v475
        %v508 = vsub.f32 %v379, %v476
        %v509 = vsub.f32 %v380, %v477
        %v510 = vsub.f32 %v381, %v478
        %v511 = vsub.f32 %v382, %v479
        %v512 = vsub.f32 %v383, %v480
        %v513 = vsub.f32 %v384, %v481
        %v514 = vsub.f32 %v385, %v482
        %v515 = vsub.f32 %v386, %v483
        %v516 = vsub.f32 %v387, %v484
        %v517 = vsub.f32 %v388, %v485
        %v518 = vmul.f32 %v486, %v486
        %v519 = vmul.f32 %v487, %v487
        %v520 = vmul.f32 %v488, %v488
        %v521 = vmul.f32 %v489, %v489
        %v522 = vmul.f32 %v490, %v490
        %v523 = vmul.f32 %v491, %v491
        %v524 = vmul.f32 %v492, %v492
        %v525 = vmul.f32 %v493, %v493
        %v526 = vmul.f32 %v494, %v494
        %v527 = vmul.f32 %v495, %v495
        %v528 = vmul.f32 %v496, %v496
        %v529 = vmul.f32 %v497, %v497
        %v530 = vmul.f32 %v498, %v498
        %v531 = vmul.f32 %v499, %v499
        %v532 = vmul.f32 %v500, %v500
        %v533 = vmul.f32 %v501, %v501
        %v534 = vmul.f32 %v502, %v502
        %v535 = vmul.f32 %v503, %v503
        %v536 = vmul.f32 %v504, %v504
        %v537 = vmul.f32 %v505, %v505
        %v538 = vmul.f32 %v506, %v506
        %v539 = vmul.f32 %v507, %v507
        %v540 = vmul.f32 %v508, %v508
        %v541 = vmul.f32 %v509, %v509
        %v542 = vmul.f32 %v510, %v510
        %v543 = vmul.f32 %v511, %v511
        %v544 = vmul.f32 %v512, %v512
        %v545 = vmul.f32 %v513, %v513
        %v546 = vmul.f32 %v514, %v514
        %v547 = vmul.f32 %v515, %v515
        %v548 = vmul.f32 %v516, %v516
        %v549 = vmul.f32 %v517, %v517
        %550 = vadd.xlane.f32.xlu0 %v518
        %v551 = vpop.xlane.xlu0 %550
        %552 = vadd.xlane.f32.xlu0 %v519
        %v553 = vpop.xlane.xlu0 %552
        %554 = vadd.xlane.f32.xlu0 %v520
        %v555 = vpop.xlane.xlu0 %554
        %556 = vadd.xlane.f32.xlu0 %v521
        %v557 = vpop.xlane.xlu0 %556
        %558 = vadd.xlane.f32.xlu0 %v522
        %v559 = vpop.xlane.xlu0 %558
        %560 = vadd.xlane.f32.xlu0 %v523
        %v561 = vpop.xlane.xlu0 %560
        %562 = vadd.xlane.f32.xlu0 %v524
        %v563 = vpop.xlane.xlu0 %562
        %564 = vadd.xlane.f32.xlu0 %v525
        %v565 = vpop.xlane.xlu0 %564
        %566 = vadd.xlane.f32.xlu0 %v526
        %v567 = vpop.xlane.xlu0 %566
        %568 = vadd.xlane.f32.xlu0 %v527
        %v569 = vpop.xlane.xlu0 %568
        %570 = vadd.xlane.f32.xlu0 %v528
        %v571 = vpop.xlane.xlu0 %570
        %572 = vadd.xlane.f32.xlu0 %v529
        %v573 = vpop.xlane.xlu0 %572
        %574 = vadd.xlane.f32.xlu0 %v530
        %v575 = vpop.xlane.xlu0 %574
        %576 = vadd.xlane.f32.xlu0 %v531
        %v577 = vpop.xlane.xlu0 %576
        %578 = vadd.xlane.f32.xlu0 %v532
        %v579 = vpop.xlane.xlu0 %578
        %580 = vadd.xlane.f32.xlu0 %v533
        %v581 = vpop.xlane.xlu0 %580
        %582 = vadd.xlane.f32.xlu0 %v534
        %v583 = vpop.xlane.xlu0 %582
        %584 = vadd.xlane.f32.xlu0 %v535
        %v585 = vpop.xlane.xlu0 %584
        %586 = vadd.xlane.f32.xlu0 %v536
        %v587 = vpop.xlane.xlu0 %586
        %588 = vadd.xlane.f32.xlu0 %v537
        %v589 = vpop.xlane.xlu0 %588
        %590 = vadd.xlane.f32.xlu0 %v538
        %v591 = vpop.xlane.xlu0 %590
        %592 = vadd.xlane.f32.xlu0 %v539
        %v593 = vpop.xlane.xlu0 %592
        %594 = vadd.xlane.f32.xlu0 %v540
        %v595 = vpop.xlane.xlu0 %594
        %596 = vadd.xlane.f32.xlu0 %v541
        %v597 = vpop.xlane.xlu0 %596
        %598 = vadd.xlane.f32.xlu0 %v542
        %v599 = vpop.xlane.xlu0 %598
        %600 = vadd.xlane.f32.xlu0 %v543
        %v601 = vpop.xlane.xlu0 %600
        %602 = vadd.xlane.f32.xlu0 %v544
        %v603 = vpop.xlane.xlu0 %602
        %604 = vadd.xlane.f32.xlu0 %v545
        %v605 = vpop.xlane.xlu0 %604
        %606 = vadd.xlane.f32.xlu0 %v546
        %v607 = vpop.xlane.xlu0 %606
        %608 = vadd.xlane.f32.xlu0 %v547
        %v609 = vpop.xlane.xlu0 %608
        %610 = vadd.xlane.f32.xlu0 %v548
        %v611 = vpop.xlane.xlu0 %610
        %612 = vadd.xlane.f32.xlu0 %v549
        %v613 = vpop.xlane.xlu0 %612
        %v614 = vmul.f32 %v551, %v453
        %v615 = vmul.f32 %v553, %v453
        %v616 = vmul.f32 %v555, %v453
        %v617 = vmul.f32 %v557, %v453
        %v618 = vmul.f32 %v559, %v453
        %v619 = vmul.f32 %v561, %v453
        %v620 = vmul.f32 %v563, %v453
        %v621 = vmul.f32 %v565, %v453
        %v622 = vmul.f32 %v567, %v453
        %v623 = vmul.f32 %v569, %v453
        %v624 = vmul.f32 %v571, %v453
        %v625 = vmul.f32 %v573, %v453
        %v626 = vmul.f32 %v575, %v453
        %v627 = vmul.f32 %v577, %v453
        %v628 = vmul.f32 %v579, %v453
        %v629 = vmul.f32 %v581, %v453
        %v630 = vmul.f32 %v583, %v453
        %v631 = vmul.f32 %v585, %v453
        %v632 = vmul.f32 %v587, %v453
        %v633 = vmul.f32 %v589, %v453
        %v634 = vmul.f32 %v591, %v453
        %v635 = vmul.f32 %v593, %v453
        %v636 = vmul.f32 %v595, %v453
        %v637 = vmul.f32 %v597, %v453
        %v638 = vmul.f32 %v599, %v453
        %v639 = vmul.f32 %v601, %v453
        %v640 = vmul.f32 %v603, %v453
        %v641 = vmul.f32 %v605, %v453
        %v642 = vmul.f32 %v607, %v453
        %v643 = vmul.f32 %v609, %v453
        %v644 = vmul.f32 %v611, %v453
        %v645 = vmul.f32 %v613, %v453
        %v646 = vadd.f32 %v614, 1e-05
        %v647 = vadd.f32 %v615, 1e-05
        %v648 = vadd.f32 %v616, 1e-05
        %v649 = vadd.f32 %v617, 1e-05
        %v650 = vadd.f32 %v618, 1e-05
        %v651 = vadd.f32 %v619, 1e-05
        %v652 = vadd.f32 %v620, 1e-05
        %v653 = vadd.f32 %v621, 1e-05
        %v654 = vadd.f32 %v622, 1e-05
        %v655 = vadd.f32 %v623, 1e-05
        %v656 = vadd.f32 %v624, 1e-05
        %v657 = vadd.f32 %v625, 1e-05
        %v658 = vadd.f32 %v626, 1e-05
        %v659 = vadd.f32 %v627, 1e-05
        %v660 = vadd.f32 %v628, 1e-05
        %v661 = vadd.f32 %v629, 1e-05
        %v662 = vadd.f32 %v630, 1e-05
        %v663 = vadd.f32 %v631, 1e-05
        %v664 = vadd.f32 %v632, 1e-05
        %v665 = vadd.f32 %v633, 1e-05
        %v666 = vadd.f32 %v634, 1e-05
        %v667 = vadd.f32 %v635, 1e-05
        %v668 = vadd.f32 %v636, 1e-05
        %v669 = vadd.f32 %v637, 1e-05
        %v670 = vadd.f32 %v638, 1e-05
        %v671 = vadd.f32 %v639, 1e-05
        %v672 = vadd.f32 %v640, 1e-05
        %v673 = vadd.f32 %v641, 1e-05
        %v674 = vadd.f32 %v642, 1e-05
        %v675 = vadd.f32 %v643, 1e-05
        %v676 = vadd.f32 %v644, 1e-05
        %v677 = vadd.f32 %v645, 1e-05
        %v678 = vrsqrt.pop %v646
        %v679 = vrsqrt.pop %v647
        %v680 = vrsqrt.pop %v648
        %v681 = vrsqrt.pop %v649
        %v682 = vrsqrt.pop %v650
        %v683 = vrsqrt.pop %v651
        %v684 = vrsqrt.pop %v652
        %v685 = vrsqrt.pop %v653
        %v686 = vrsqrt.pop %v654
        %v687 = vrsqrt.pop %v655
        %v688 = vrsqrt.pop %v656
        %v689 = vrsqrt.pop %v657
        %v690 = vrsqrt.pop %v658
        %v691 = vrsqrt.pop %v659
        %v692 = vrsqrt.pop %v660
        %v693 = vrsqrt.pop %v661
        %v694 = vrsqrt.pop %v662
        %v695 = vrsqrt.pop %v663
        %v696 = vrsqrt.pop %v664
        %v697 = vrsqrt.pop %v665
        %v698 = vrsqrt.pop %v666
        %v699 = vrsqrt.pop %v667
        %v700 = vrsqrt.pop %v668
        %v701 = vrsqrt.pop %v669
        %v702 = vrsqrt.pop %v670
        %v703 = vrsqrt.pop %v671
        %v704 = vrsqrt.pop %v672
        %v705 = vrsqrt.pop %v673
        %v706 = vrsqrt.pop %v674
        %v707 = vrsqrt.pop %v675
        %v708 = vrsqrt.pop %v676
        %v709 = vrsqrt.pop %v677
        %v710 = vmul.f32 %v486, %v678
        %v711 = vmul.f32 %v487, %v679
        %v712 = vmul.f32 %v488, %v680
        %v713 = vmul.f32 %v489, %v681
        %v714 = vmul.f32 %v490, %v682
        %v715 = vmul.f32 %v491, %v683
        %v716 = vmul.f32 %v492, %v684
        %v717 = vmul.f32 %v493, %v685
        %v718 = vmul.f32 %v494, %v686
        %v719 = vmul.f32 %v495, %v687
        %v720 = vmul.f32 %v496, %v688
        %v721 = vmul.f32 %v497, %v689
        %v722 = vmul.f32 %v498, %v690
        %v723 = vmul.f32 %v499, %v691
        %v724 = vmul.f32 %v500, %v692
        %v725 = vmul.f32 %v501, %v693
        %v726 = vmul.f32 %v502, %v694
        %v727 = vmul.f32 %v503, %v695
        %v728 = vmul.f32 %v504, %v696
        %v729 = vmul.f32 %v505, %v697
        %v730 = vmul.f32 %v506, %v698
        %v731 = vmul.f32 %v507, %v699
        %v732 = vmul.f32 %v508, %v700
        %v733 = vmul.f32 %v509, %v701
        %v734 = vmul.f32 %v510, %v702
        %v735 = vmul.f32 %v511, %v703
        %v736 = vmul.f32 %v512, %v704
        %v737 = vmul.f32 %v513, %v705
        %v738 = vmul.f32 %v514, %v706
        %v739 = vmul.f32 %v515, %v707
        %v740 = vmul.f32 %v516, %v708
        %v741 = vmul.f32 %v517, %v709
        %v742 = vld [vmem:[%s1] sm:$0x1]
        %v744 = vlaneseq
        %v745 = vshrl.u32 %v744, 7
        %v746 = vsub.s32 0, %v745
        %v747 = vrot.slane %v742, %v746
        %v749 = vmul.f32 %v710, %v747
        %v750 = vmul.f32 %v711, %v747
        %v751 = vmul.f32 %v712, %v747
        %v752 = vmul.f32 %v713, %v747
        %v753 = vmul.f32 %v714, %v747
        %v754 = vmul.f32 %v715, %v747
        %v755 = vmul.f32 %v716, %v747
        %v756 = vmul.f32 %v717, %v747
        %v757 = vmul.f32 %v718, %v747
        %v758 = vmul.f32 %v719, %v747
        %v759 = vmul.f32 %v720, %v747
        %v760 = vmul.f32 %v721, %v747
        %v761 = vmul.f32 %v722, %v747
        %v762 = vmul.f32 %v723, %v747
        %v763 = vmul.f32 %v724, %v747
        %v764 = vmul.f32 %v725, %v747
        %v765 = vmul.f32 %v726, %v747
        %v766 = vmul.f32 %v727, %v747
        %v767 = vmul.f32 %v728, %v747
        %v768 = vmul.f32 %v729, %v747
        %v769 = vmul.f32 %v730, %v747
        %v770 = vmul.f32 %v731, %v747
        %v771 = vmul.f32 %v732, %v747
        %v772 = vmul.f32 %v733, %v747
        %v773 = vmul.f32 %v734, %v747
        %v774 = vmul.f32 %v735, %v747
        %v775 = vmul.f32 %v736, %v747
        %v776 = vmul.f32 %v737, %v747
        %v777 = vmul.f32 %v738, %v747
        %v778 = vmul.f32 %v739, %v747
        %v779 = vmul.f32 %v740, %v747
        %v780 = vmul.f32 %v741, %v747
        %v781 = vld [vmem:[%s2] sm:$0x1]
        %v783 = vlaneseq
        %v784 = vshrl.u32 %v783, 7
        %v785 = vsub.s32 0, %v784
        %v786 = vrot.slane %v781, %v785
        %v788 = vadd.f32 %v749, %v786
        %v789 = vadd.f32 %v750, %v786
        %v790 = vadd.f32 %v751, %v786
        %v791 = vadd.f32 %v752, %v786
        %v792 = vadd.f32 %v753, %v786
        %v793 = vadd.f32 %v754, %v786
        %v794 = vadd.f32 %v755, %v786
        %v795 = vadd.f32 %v756, %v786
        %v796 = vadd.f32 %v757, %v786
        %v797 = vadd.f32 %v758, %v786
        %v798 = vadd.f32 %v759, %v786
        %v799 = vadd.f32 %v760, %v786
        %v800 = vadd.f32 %v761, %v786
        %v801 = vadd.f32 %v762, %v786
        %v802 = vadd.f32 %v763, %v786
        %v803 = vadd.f32 %v764, %v786
        %v804 = vadd.f32 %v765, %v786
        %v805 = vadd.f32 %v766, %v786
        %v806 = vadd.f32 %v767, %v786
        %v807 = vadd.f32 %v768, %v786
        %v808 = vadd.f32 %v769, %v786
        %v809 = vadd.f32 %v770, %v786
        %v810 = vadd.f32 %v771, %v786
        %v811 = vadd.f32 %v772, %v786
        %v812 = vadd.f32 %v773, %v786
        %v813 = vadd.f32 %v774, %v786
        %v814 = vadd.f32 %v775, %v786
        %v815 = vadd.f32 %v776, %v786
        %v816 = vadd.f32 %v777, %v786
        %v817 = vadd.f32 %v778, %v786
        %v818 = vadd.f32 %v779, %v786
        %v819 = vadd.f32 %v780, %v786
        %v820 = vpack.c.bf16 %v789, %v788
        %v821 = vpack.c.bf16 %v791, %v790
        %v822 = vpack.c.bf16 %v793, %v792
        %v823 = vpack.c.bf16 %v795, %v794
        %v824 = vpack.c.bf16 %v797, %v796
        %v825 = vpack.c.bf16 %v799, %v798
        %v826 = vpack.c.bf16 %v801, %v800
        %v827 = vpack.c.bf16 %v803, %v802
        %v828 = vpack.c.bf16 %v805, %v804
        %v829 = vpack.c.bf16 %v807, %v806
        %v830 = vpack.c.bf16 %v809, %v808
        %v831 = vpack.c.bf16 %v811, %v810
        %v832 = vpack.c.bf16 %v813, %v812
        %v833 = vpack.c.bf16 %v815, %v814
        %v834 = vpack.c.bf16 %v817, %v816
        %v835 = vpack.c.bf16 %v819, %v818
        %v836 = vld [vmem:[#allocation5] sm:$0xff]
        %v837 = vld [vmem:[#allocation5 + $0x8] sm:$0xf]
        %v838 = vld [vmem:[#allocation5 + $0xc] sm:$0xff]
        %v839 = vld [vmem:[#allocation5 + $0x14] sm:$0xf]
        %v840 = vld [vmem:[#allocation5 + $0x18] sm:$0xff]
        %v841 = vld [vmem:[#allocation5 + $0x20] sm:$0xf]
        %v842 = vld [vmem:[#allocation5 + $0x24] sm:$0xff]
        %v843 = vld [vmem:[#allocation5 + $0x2c] sm:$0xf]
        %v844 = vld [vmem:[#allocation5 + $0x30] sm:$0xff]
        %v845 = vld [vmem:[#allocation5 + $0x38] sm:$0xf]
        %v846 = vld [vmem:[#allocation5 + $0x3c] sm:$0xff]
        %v847 = vld [vmem:[#allocation5 + $0x44] sm:$0xf]
        %v848 = vld [vmem:[#allocation5 + $0x48] sm:$0xff]
        %v849 = vld [vmem:[#allocation5 + $0x50] sm:$0xf]
        %v850 = vld [vmem:[#allocation5 + $0x54] sm:$0xff]
        %v851 = vld [vmem:[#allocation5 + $0x5c] sm:$0xf]
        %v852 = vld [vmem:[#allocation5 + $0x60] sm:$0xff]
        %v853 = vld [vmem:[#allocation5 + $0x68] sm:$0xf]
        %v854 = vld [vmem:[#allocation5 + $0x6c] sm:$0xff]
        %v855 = vld [vmem:[#allocation5 + $0x74] sm:$0xf]
        %v856 = vld [vmem:[#allocation5 + $0x78] sm:$0xff]
        %v857 = vld [vmem:[#allocation5 + $0x80] sm:$0xf]
        %v858 = vld [vmem:[#allocation5 + $0x84] sm:$0xff]
        %v859 = vld [vmem:[#allocation5 + $0x8c] sm:$0xf]
        %v860 = vld [vmem:[#allocation5 + $0x90] sm:$0xff]
        %v861 = vld [vmem:[#allocation5 + $0x98] sm:$0xf]
        %v862 = vld [vmem:[#allocation5 + $0x9c] sm:$0xff]
        %v863 = vld [vmem:[#allocation5 + $0xa4] sm:$0xf]
        %v864 = vld [vmem:[#allocation5 + $0xa8] sm:$0xff]
        %v865 = vld [vmem:[#allocation5 + $0xb0] sm:$0xf]
        %v866 = vld [vmem:[#allocation5 + $0xb4] sm:$0xff]
        %v867 = vld [vmem:[#allocation5 + $0xbc] sm:$0xf]
        %v868 = vld [vmem:[%s4] sm:$0x7]
        %v870 = vlaneseq
        %v871 = vshrl.u32 %v870, 7
        %v872 = vsub.s32 0, %v871
        %v873 = vrot.slane %v868, %v872
        %v874 = vlaneseq
        %v875 = vshrl.u32 %v874, 7
        %v876 = vsub.s32 1, %v875
        %v877 = vrot.slane %v868, %v876
        %v878 = vlaneseq
        %v879 = vshrl.u32 %v878, 7
        %v880 = vsub.s32 2, %v879
        %v881 = vrot.slane %v868, %v880
        %v917 = vunpack.c.l.b16 %v836
        %v918 = vunpack.c.h.b16 %v836
        %v919 = vunpack.c.l.b16 %v837
        %v920 = vunpack.c.l.b16 %v838
        %v921 = vunpack.c.h.b16 %v838
        %v922 = vunpack.c.l.b16 %v839
        %v923 = vunpack.c.l.b16 %v840
        %v924 = vunpack.c.h.b16 %v840
        %v925 = vunpack.c.l.b16 %v841
        %v926 = vunpack.c.l.b16 %v842
        %v927 = vunpack.c.h.b16 %v842
        %v928 = vunpack.c.l.b16 %v843
        %v929 = vunpack.c.l.b16 %v844
        %v930 = vunpack.c.h.b16 %v844
        %v931 = vunpack.c.l.b16 %v845
        %v932 = vunpack.c.l.b16 %v846
        %v933 = vunpack.c.h.b16 %v846
        %v934 = vunpack.c.l.b16 %v847
        %v935 = vunpack.c.l.b16 %v848
        %v936 = vunpack.c.h.b16 %v848
        %v937 = vunpack.c.l.b16 %v849
        %v938 = vunpack.c.l.b16 %v850
        %v939 = vunpack.c.h.b16 %v850
        %v940 = vunpack.c.l.b16 %v851
        %v941 = vunpack.c.l.b16 %v852
        %v942 = vunpack.c.h.b16 %v852
        %v943 = vunpack.c.l.b16 %v853
        %v944 = vunpack.c.l.b16 %v854
        %v945 = vunpack.c.h.b16 %v854
        %v946 = vunpack.c.l.b16 %v855
        %v947 = vunpack.c.l.b16 %v856
        %v948 = vunpack.c.h.b16 %v856
        %v949 = vunpack.c.l.b16 %v857
        %v950 = vunpack.c.l.b16 %v858
        %v951 = vunpack.c.h.b16 %v858
        %v952 = vunpack.c.l.b16 %v859
        %v953 = vunpack.c.l.b16 %v860
        %v954 = vunpack.c.h.b16 %v860
        %v955 = vunpack.c.l.b16 %v861
        %v956 = vunpack.c.l.b16 %v862
        %v957 = vunpack.c.h.b16 %v862
        %v958 = vunpack.c.l.b16 %v863
        %v959 = vunpack.c.l.b16 %v864
        %v960 = vunpack.c.h.b16 %v864
        %v961 = vunpack.c.l.b16 %v865
        %v962 = vunpack.c.l.b16 %v866
        %v963 = vunpack.c.h.b16 %v866
        %v964 = vunpack.c.l.b16 %v867
        %v965 = vpack.c.b16 %v920, %v917
        %v966 = vpack.c.b16 %v921, %v918
        %v967 = vpack.c.b16 %v922, %v919
        %v968 = vpack.c.b16 %v926, %v923
        %v969 = vpack.c.b16 %v927, %v924
        %v970 = vpack.c.b16 %v928, %v925
        %v971 = vpack.c.b16 %v932, %v929
        %v972 = vpack.c.b16 %v933, %v930
        %v973 = vpack.c.b16 %v934, %v931
        %v974 = vpack.c.b16 %v938, %v935
        %v975 = vpack.c.b16 %v939, %v936
        %v976 = vpack.c.b16 %v940, %v937
        %v977 = vpack.c.b16 %v944, %v941
        %v978 = vpack.c.b16 %v945, %v942
        %v979 = vpack.c.b16 %v946, %v943
        %v980 = vpack.c.b16 %v950, %v947
        %v981 = vpack.c.b16 %v951, %v948
        %v982 = vpack.c.b16 %v952, %v949
        %v983 = vpack.c.b16 %v956, %v953
        %v984 = vpack.c.b16 %v957, %v954
        %v985 = vpack.c.b16 %v958, %v955
        %v986 = vpack.c.b16 %v962, %v959
        %v987 = vpack.c.b16 %v963, %v960
        %v988 = vpack.c.b16 %v964, %v961
        %1013 = vmatprep.subr.bf16.mxu0 %v966
        %1014 = vmatpush1.bf16.msra.mxu0 %v965
        %1015 = vmatprep.subr.bf16.mxu0 %v969
        %1016 = vmatpush1.bf16.msra.mxu0 %v968
        %1017 = vmatprep.subr.bf16.mxu0 %v972
        %1018 = vmatpush1.bf16.msra.mxu0 %v971
        %1019 = vmatprep.subr.bf16.mxu0 %v975
        %1020 = vmatpush1.bf16.msra.mxu0 %v974
        %1021 = vmatprep.subr.bf16.mxu0 %v978
        %1022 = vmatpush1.bf16.msra.mxu0 %v977
        %1023 = vmatprep.subr.bf16.mxu0 %v981
        %1024 = vmatpush1.bf16.msra.mxu0 %v980
        %1025 = vmatprep.subr.bf16.mxu0 %v984
        %1026 = vmatpush1.bf16.msra.mxu0 %v983
        %1027 = vmatprep.subr.bf16.mxu0 %v987
        %1028 = vmatpush1.bf16.msra.mxu0 %v986
        %1029 = vmatprep.subr.bf16.mxu0 0
        %1030 = vmatpush1.bf16.msra.mxu0 0
        %1031 = vmatprep.subr.bf16.mxu0 0
        %1032 = vmatpush1.bf16.msra.mxu0 0
        %1033 = vmatprep.subr.bf16.mxu0 0
        %1034 = vmatpush1.bf16.msra.mxu0 0
        %1035 = vmatprep.subr.bf16.mxu0 0
        %1036 = vmatpush1.bf16.msra.mxu0 0
        %1037 = vmatprep.subr.bf16.mxu0 0
        %1038 = vmatpush1.bf16.msra.mxu0 0
        %1039 = vmatprep.subr.bf16.mxu0 0
        %1040 = vmatpush1.bf16.msra.mxu0 0
        %1041 = vmatprep.subr.bf16.mxu0 0
        %1042 = vmatpush1.bf16.msra.mxu0 0
        %1043 = vmatprep.subr.bf16.mxu0 0
        %1044 = vmatpush1.bf16.msra.mxu0 0
        %1045 = vmatprep.mubr.bf16.mxu0 0
        %1046 = vmatmul.mubr.bf16.gmra.mrb[0].mxu0 %v820
        %v1047 = vpop.f32.mrb[0].mxu0
        %v1048 = vadd.f32 %v873, %v1047
        %v1049 = vpop.f32.mrb[0].mxu0
        %v1050 = vadd.f32 %v877, %v1049
        %v1051 = vpop.f32.mrb[0].mxu0
        %v1052 = vadd.f32 %v873, %v1051
        %v1053 = vpop.f32.mrb[0].mxu0
        %v1054 = vadd.f32 %v877, %v1053
        %1055 = vmatprep.mubr.bf16.mxu0 0
        %1056 = vmatmul.mubr.bf16.gmra.mrb[0].mxu0 %v821
        %v1057 = vpop.f32.mrb[0].mxu0
        %v1058 = vadd.f32 %v873, %v1057
        %v1059 = vpop.f32.mrb[0].mxu0
        %v1060 = vadd.f32 %v877, %v1059
        %v1061 = vpop.f32.mrb[0].mxu0
        %v1062 = vadd.f32 %v873, %v1061
        %v1063 = vpop.f32.mrb[0].mxu0
        %v1064 = vadd.f32 %v877, %v1063
        %1065 = vmatprep.mubr.bf16.mxu0 0
        %1066 = vmatmul.mubr.bf16.gmra.mrb[0].mxu0 %v822
        %v1067 = vpop.f32.mrb[0].mxu0
        %v1068 = vadd.f32 %v873, %v1067
        %v1069 = vpop.f32.mrb[0].mxu0
        %v1070 = vadd.f32 %v877, %v1069
        %v1071 = vpop.f32.mrb[0].mxu0
        %v1072 = vadd.f32 %v873, %v1071
        %v1073 = vpop.f32.mrb[0].mxu0
        %v1074 = vadd.f32 %v877, %v1073
        %1075 = vmatprep.mubr.bf16.mxu0 0
        %1076 = vmatmul.mubr.bf16.gmra.mrb[0].mxu0 %v823
        %v1077 = vpop.f32.mrb[0].mxu0
        %v1078 = vadd.f32 %v873, %v1077
        %v1079 = vpop.f32.mrb[0].mxu0
        %v1080 = vadd.f32 %v877, %v1079
        %v1081 = vpop.f32.mrb[0].mxu0
        %v1082 = vadd.f32 %v873, %v1081
        %v1083 = vpop.f32.mrb[0].mxu0
        %v1084 = vadd.f32 %v877, %v1083
        %1085 = vmatprep.mubr.bf16.mxu0 0
        %1086 = vmatmul.mubr.bf16.gmra.mrb[0].mxu0 %v824
        %v1087 = vpop.f32.mrb[0].mxu0
        %v1088 = vadd.f32 %v873, %v1087
        %v1089 = vpop.f32.mrb[0].mxu0
        %v1090 = vadd.f32 %v877, %v1089
        %v1091 = vpop.f32.mrb[0].mxu0
        %v1092 = vadd.f32 %v873, %v1091
        %v1093 = vpop.f32.mrb[0].mxu0
        %v1094 = vadd.f32 %v877, %v1093
        %1095 = vmatprep.mubr.bf16.mxu0 0
        %1096 = vmatmul.mubr.bf16.gmra.mrb[0].mxu0 %v825
        %v1097 = vpop.f32.mrb[0].mxu0
        %v1098 = vadd.f32 %v873, %v1097
        %v1099 = vpop.f32.mrb[0].mxu0
        %v1100 = vadd.f32 %v877, %v1099
        %v1101 = vpop.f32.mrb[0].mxu0
        %v1102 = vadd.f32 %v873, %v1101
        %v1103 = vpop.f32.mrb[0].mxu0
        %v1104 = vadd.f32 %v877, %v1103
        %1105 = vmatprep.mubr.bf16.mxu0 0
        %1106 = vmatmul.mubr.bf16.gmra.mrb[0].mxu0 %v826
        %v1107 = vpop.f32.mrb[0].mxu0
        %v1108 = vadd.f32 %v873, %v1107
        %v1109 = vpop.f32.mrb[0].mxu0
        %v1110 = vadd.f32 %v877, %v1109
        %v1111 = vpop.f32.mrb[0].mxu0
        %v1112 = vadd.f32 %v873, %v1111
        %v1113 = vpop.f32.mrb[0].mxu0
        %v1114 = vadd.f32 %v877, %v1113
        %1115 = vmatprep.mubr.bf16.mxu0 0
        %1116 = vmatmul.mubr.bf16.gmra.mrb[0].mxu0 %v827
        %v1117 = vpop.f32.mrb[0].mxu0
        %v1118 = vadd.f32 %v873, %v1117
        %v1119 = vpop.f32.mrb[0].mxu0
        %v1120 = vadd.f32 %v877, %v1119
        %v1121 = vpop.f32.mrb[0].mxu0
        %v1122 = vadd.f32 %v873, %v1121
        %v1123 = vpop.f32.mrb[0].mxu0
        %v1124 = vadd.f32 %v877, %v1123
        %1125 = vmatprep.mubr.bf16.mxu0 0
        %1126 = vmatmul.mubr.bf16.gmra.mrb[0].mxu0 %v828
        %v1127 = vpop.f32.mrb[0].mxu0
        %v1128 = vadd.f32 %v873, %v1127
        %v1129 = vpop.f32.mrb[0].mxu0
        %v1130 = vadd.f32 %v877, %v1129
        %v1131 = vpop.f32.mrb[0].mxu0
        %v1132 = vadd.f32 %v873, %v1131
        %v1133 = vpop.f32.mrb[0].mxu0
        %v1134 = vadd.f32 %v877, %v1133
        %1135 = vmatprep.mubr.bf16.mxu0 0
        %1136 = vmatmul.mubr.bf16.gmra.mrb[0].mxu0 %v829
        %v1137 = vpop.f32.mrb[0].mxu0
        %v1138 = vadd.f32 %v873, %v1137
        %v1139 = vpop.f32.mrb[0].mxu0
        %v1140 = vadd.f32 %v877, %v1139
        %v1141 = vpop.f32.mrb[0].mxu0
        %v1142 = vadd.f32 %v873, %v1141
        %v1143 = vpop.f32.mrb[0].mxu0
        %v1144 = vadd.f32 %v877, %v1143
        %1145 = vmatprep.mubr.bf16.mxu0 0
        %1146 = vmatmul.mubr.bf16.gmra.mrb[0].mxu0 %v830
        %v1147 = vpop.f32.mrb[0].mxu0
        %v1148 = vadd.f32 %v873, %v1147
        %v1149 = vpop.f32.mrb[0].mxu0
        %v1150 = vadd.f32 %v877, %v1149
        %v1151 = vpop.f32.mrb[0].mxu0
        %v1152 = vadd.f32 %v873, %v1151
        %v1153 = vpop.f32.mrb[0].mxu0
        %v1154 = vadd.f32 %v877, %v1153
        %1155 = vmatprep.mubr.bf16.mxu0 0
        %1156 = vmatmul.mubr.bf16.gmra.mrb[0].mxu0 %v831
        %v1157 = vpop.f32.mrb[0].mxu0
        %v1158 = vadd.f32 %v873, %v1157
        %v1159 = vpop.f32.mrb[0].mxu0
        %v1160 = vadd.f32 %v877, %v1159
        %v1161 = vpop.f32.mrb[0].mxu0
        %v1162 = vadd.f32 %v873, %v1161
        %v1163 = vpop.f32.mrb[0].mxu0
        %v1164 = vadd.f32 %v877, %v1163
        %1165 = vmatprep.mubr.bf16.mxu0 0
        %1166 = vmatmul.mubr.bf16.gmra.mrb[0].mxu0 %v832
        %v1167 = vpop.f32.mrb[0].mxu0
        %v1168 = vadd.f32 %v873, %v1167
        %v1169 = vpop.f32.mrb[0].mxu0
        %v1170 = vadd.f32 %v877, %v1169
        %v1171 = vpop.f32.mrb[0].mxu0
        %v1172 = vadd.f32 %v873, %v1171
        %v1173 = vpop.f32.mrb[0].mxu0
        %v1174 = vadd.f32 %v877, %v1173
        %1175 = vmatprep.mubr.bf16.mxu0 0
        %1176 = vmatmul.mubr.bf16.gmra.mrb[0].mxu0 %v833
        %v1177 = vpop.f32.mrb[0].mxu0
        %v1178 = vadd.f32 %v873, %v1177
        %v1179 = vpop.f32.mrb[0].mxu0
        %v1180 = vadd.f32 %v877, %v1179
        %v1181 = vpop.f32.mrb[0].mxu0
        %v1182 = vadd.f32 %v873, %v1181
        %v1183 = vpop.f32.mrb[0].mxu0
        %v1184 = vadd.f32 %v877, %v1183
        %1185 = vmatprep.mubr.bf16.mxu0 0
        %1186 = vmatmul.mubr.bf16.gmra.mrb[0].mxu0 %v834
        %v1187 = vpop.f32.mrb[0].mxu0
        %v1188 = vadd.f32 %v873, %v1187
        %v1189 = vpop.f32.mrb[0].mxu0
        %v1190 = vadd.f32 %v877, %v1189
        %v1191 = vpop.f32.mrb[0].mxu0
        %v1192 = vadd.f32 %v873, %v1191
        %v1193 = vpop.f32.mrb[0].mxu0
        %v1194 = vadd.f32 %v877, %v1193
        %1195 = vmatprep.mubr.bf16.mxu0 0
        %1196 = vmatmul.mubr.bf16.gmra.mrb[0].mxu0 %v835
        %v1197 = vpop.f32.mrb[0].mxu0
        %v1198 = vadd.f32 %v873, %v1197
        %v1199 = vpop.f32.mrb[0].mxu0
        %v1200 = vadd.f32 %v877, %v1199
        %v1201 = vpop.f32.mrb[0].mxu0
        %v1202 = vadd.f32 %v873, %v1201
        %v1203 = vpop.f32.mrb[0].mxu0
        %v1204 = vadd.f32 %v877, %v1203
        %1205 = vdwg.mxu0
        %1206 = vmatprep.subr.bf16.mxu0 0
        %1207 = vmatpush1.bf16.msra.mxu0 %v967
        %1208 = vmatprep.subr.bf16.mxu0 0
        %1209 = vmatpush1.bf16.msra.mxu0 %v970
        %1210 = vmatprep.subr.bf16.mxu0 0
        %1211 = vmatpush1.bf16.msra.mxu0 %v973
        %1212 = vmatprep.subr.bf16.mxu0 0
        %1213 = vmatpush1.bf16.msra.mxu0 %v976
        %1214 = vmatprep.subr.bf16.mxu0 0
        %1215 = vmatpush1.bf16.msra.mxu0 %v979
        %1216 = vmatprep.subr.bf16.mxu0 0
        %1217 = vmatpush1.bf16.msra.mxu0 %v982
        %1218 = vmatprep.subr.bf16.mxu0 0
        %1219 = vmatpush1.bf16.msra.mxu0 %v985
        %1220 = vmatprep.subr.bf16.mxu0 0
        %1221 = vmatpush1.bf16.msra.mxu0 %v988
        %1222 = vmatprep.subr.bf16.mxu0 0
        %1223 = vmatpush1.bf16.msra.mxu0 0
        %1224 = vmatprep.subr.bf16.mxu0 0
        %1225 = vmatpush1.bf16.msra.mxu0 0
        %1226 = vmatprep.subr.bf16.mxu0 0
        %1227 = vmatpush1.bf16.msra.mxu0 0
        %1228 = vmatprep.subr.bf16.mxu0 0
        %1229 = vmatpush1.bf16.msra.mxu0 0
        %1230 = vmatprep.subr.bf16.mxu0 0
        %1231 = vmatpush1.bf16.msra.mxu0 0
        %1232 = vmatprep.subr.bf16.mxu0 0
        %1233 = vmatpush1.bf16.msra.mxu0 0
        %1234 = vmatprep.subr.bf16.mxu0 0
        %1235 = vmatpush1.bf16.msra.mxu0 0
        %1236 = vmatprep.subr.bf16.mxu0 0
        %1237 = vmatpush1.bf16.msra.mxu0 0
        %1238 = vmatprep.mubr.bf16.mxu0 0
        %1239 = vmatmul.mubr.bf16.gmra.mrb[0].mxu0 %v820
        %v1240 = vpop.f32.mrb[0].mxu0
        %v1241 = vadd.f32 %v881, %v1240
        %v1242 = vpop.f32.mrb[0].mxu0
        %v1243 = vpop.f32.mrb[0].mxu0
        %v1244 = vadd.f32 %v881, %v1243
        %v1245 = vpop.f32.mrb[0].mxu0
        %1246 = vmatprep.mubr.bf16.mxu0 0
        %1247 = vmatmul.mubr.bf16.gmra.mrb[0].mxu0 %v821
        %v1248 = vpop.f32.mrb[0].mxu0
        %v1249 = vadd.f32 %v881, %v1248
        %v1250 = vpop.f32.mrb[0].mxu0
        %v1251 = vpop.f32.mrb[0].mxu0
        %v1252 = vadd.f32 %v881, %v1251
        %v1253 = vpop.f32.mrb[0].mxu0
        %1254 = vmatprep.mubr.bf16.mxu0 0
        %1255 = vmatmul.mubr.bf16.gmra.mrb[0].mxu0 %v822
        %v1256 = vpop.f32.mrb[0].mxu0
        %v1257 = vadd.f32 %v881, %v1256
        %v1258 = vpop.f32.mrb[0].mxu0
        %v1259 = vpop.f32.mrb[0].mxu0
        %v1260 = vadd.f32 %v881, %v1259
        %v1261 = vpop.f32.mrb[0].mxu0
        %1262 = vmatprep.mubr.bf16.mxu0 0
        %1263 = vmatmul.mubr.bf16.gmra.mrb[0].mxu0 %v823
        %v1264 = vpop.f32.mrb[0].mxu0
        %v1265 = vadd.f32 %v881, %v1264
        %v1266 = vpop.f32.mrb[0].mxu0
        %v1267 = vpop.f32.mrb[0].mxu0
        %v1268 = vadd.f32 %v881, %v1267
        %v1269 = vpop.f32.mrb[0].mxu0
        %1270 = vmatprep.mubr.bf16.mxu0 0
        %1271 = vmatmul.mubr.bf16.gmra.mrb[0].mxu0 %v824
        %v1272 = vpop.f32.mrb[0].mxu0
        %v1273 = vadd.f32 %v881, %v1272
        %v1274 = vpop.f32.mrb[0].mxu0
        %v1275 = vpop.f32.mrb[0].mxu0
        %v1276 = vadd.f32 %v881, %v1275
        %v1277 = vpop.f32.mrb[0].mxu0
        %1278 = vmatprep.mubr.bf16.mxu0 0
        %1279 = vmatmul.mubr.bf16.gmra.mrb[0].mxu0 %v825
        %v1280 = vpop.f32.mrb[0].mxu0
        %v1281 = vadd.f32 %v881, %v1280
        %v1282 = vpop.f32.mrb[0].mxu0
        %v1283 = vpop.f32.mrb[0].mxu0
        %v1284 = vadd.f32 %v881, %v1283
        %v1285 = vpop.f32.mrb[0].mxu0
        %1286 = vmatprep.mubr.bf16.mxu0 0
        %1287 = vmatmul.mubr.bf16.gmra.mrb[0].mxu0 %v826
        %v1288 = vpop.f32.mrb[0].mxu0
        %v1289 = vadd.f32 %v881, %v1288
        %v1290 = vpop.f32.mrb[0].mxu0
        %v1291 = vpop.f32.mrb[0].mxu0
        %v1292 = vadd.f32 %v881, %v1291
        %v1293 = vpop.f32.mrb[0].mxu0
        %1294 = vmatprep.mubr.bf16.mxu0 0
        %1295 = vmatmul.mubr.bf16.gmra.mrb[0].mxu0 %v827
        %v1296 = vpop.f32.mrb[0].mxu0
        %v1297 = vadd.f32 %v881, %v1296
        %v1298 = vpop.f32.mrb[0].mxu0
        %v1299 = vpop.f32.mrb[0].mxu0
        %v1300 = vadd.f32 %v881, %v1299
        %v1301 = vpop.f32.mrb[0].mxu0
        %1302 = vmatprep.mubr.bf16.mxu0 0
        %1303 = vmatmul.mubr.bf16.gmra.mrb[0].mxu0 %v828
        %v1304 = vpop.f32.mrb[0].mxu0
        %v1305 = vadd.f32 %v881, %v1304
        %v1306 = vpop.f32.mrb[0].mxu0
        %v1307 = vpop.f32.mrb[0].mxu0
        %v1308 = vadd.f32 %v881, %v1307
        %v1309 = vpop.f32.mrb[0].mxu0
        %1310 = vmatprep.mubr.bf16.mxu0 0
        %1311 = vmatmul.mubr.bf16.gmra.mrb[0].mxu0 %v829
        %v1312 = vpop.f32.mrb[0].mxu0
        %v1313 = vadd.f32 %v881, %v1312
        %v1314 = vpop.f32.mrb[0].mxu0
        %v1315 = vpop.f32.mrb[0].mxu0
        %v1316 = vadd.f32 %v881, %v1315
        %v1317 = vpop.f32.mrb[0].mxu0
        %1318 = vmatprep.mubr.bf16.mxu0 0
        %1319 = vmatmul.mubr.bf16.gmra.mrb[0].mxu0 %v830
        %v1320 = vpop.f32.mrb[0].mxu0
        %v1321 = vadd.f32 %v881, %v1320
        %v1322 = vpop.f32.mrb[0].mxu0
        %v1323 = vpop.f32.mrb[0].mxu0
        %v1324 = vadd.f32 %v881, %v1323
        %v1325 = vpop.f32.mrb[0].mxu0
        %1326 = vmatprep.mubr.bf16.mxu0 0
        %1327 = vmatmul.mubr.bf16.gmra.mrb[0].mxu0 %v831
        %v1328 = vpop.f32.mrb[0].mxu0
        %v1329 = vadd.f32 %v881, %v1328
        %v1330 = vpop.f32.mrb[0].mxu0
        %v1331 = vpop.f32.mrb[0].mxu0
        %v1332 = vadd.f32 %v881, %v1331
        %v1333 = vpop.f32.mrb[0].mxu0
        %1334 = vmatprep.mubr.bf16.mxu0 0
        %1335 = vmatmul.mubr.bf16.gmra.mrb[0].mxu0 %v832
        %v1336 = vpop.f32.mrb[0].mxu0
        %v1337 = vadd.f32 %v881, %v1336
        %v1338 = vpop.f32.mrb[0].mxu0
        %v1339 = vpop.f32.mrb[0].mxu0
        %v1340 = vadd.f32 %v881, %v1339
        %v1341 = vpop.f32.mrb[0].mxu0
        %1342 = vmatprep.mubr.bf16.mxu0 0
        %1343 = vmatmul.mubr.bf16.gmra.mrb[0].mxu0 %v833
        %v1344 = vpop.f32.mrb[0].mxu0
        %v1345 = vadd.f32 %v881, %v1344
        %v1346 = vpop.f32.mrb[0].mxu0
        %v1347 = vpop.f32.mrb[0].mxu0
        %v1348 = vadd.f32 %v881, %v1347
        %v1349 = vpop.f32.mrb[0].mxu0
        %1350 = vmatprep.mubr.bf16.mxu0 0
        %1351 = vmatmul.mubr.bf16.gmra.mrb[0].mxu0 %v834
        %v1352 = vpop.f32.mrb[0].mxu0
        %v1353 = vadd.f32 %v881, %v1352
        %v1354 = vpop.f32.mrb[0].mxu0
        %v1355 = vpop.f32.mrb[0].mxu0
        %v1356 = vadd.f32 %v881, %v1355
        %v1357 = vpop.f32.mrb[0].mxu0
        %1358 = vmatprep.mubr.bf16.mxu0 0
        %1359 = vmatmul.mubr.bf16.gmra.mrb[0].mxu0 %v835
        %v1360 = vpop.f32.mrb[0].mxu0
        %v1361 = vadd.f32 %v881, %v1360
        %v1362 = vpop.f32.mrb[0].mxu0
        %v1363 = vpop.f32.mrb[0].mxu0
        %v1364 = vadd.f32 %v881, %v1363
        %v1365 = vpop.f32.mrb[0].mxu0
        %1366 = vdwg.mxu0
        %v1367 = vmul.f32 %v1048, 0.088388346
        %v1368 = vmul.f32 %v1052, 0.088388346
        %v1369 = vmul.f32 %v1058, 0.088388346
        %v1370 = vmul.f32 %v1062, 0.088388346
        %v1371 = vmul.f32 %v1068, 0.088388346
        %v1372 = vmul.f32 %v1072, 0.088388346
        %v1373 = vmul.f32 %v1078, 0.088388346
        %v1374 = vmul.f32 %v1082, 0.088388346
        %v1375 = vmul.f32 %v1088, 0.088388346
        %v1376 = vmul.f32 %v1092, 0.088388346
        %v1377 = vmul.f32 %v1098, 0.088388346
        %v1378 = vmul.f32 %v1102, 0.088388346
        %v1379 = vmul.f32 %v1108, 0.088388346
        %v1380 = vmul.f32 %v1112, 0.088388346
        %v1381 = vmul.f32 %v1118, 0.088388346
        %v1382 = vmul.f32 %v1122, 0.088388346
        %v1383 = vmul.f32 %v1128, 0.088388346
        %v1384 = vmul.f32 %v1132, 0.088388346
        %v1385 = vmul.f32 %v1138, 0.088388346
        %v1386 = vmul.f32 %v1142, 0.088388346
        %v1387 = vmul.f32 %v1148, 0.088388346
        %v1388 = vmul.f32 %v1152, 0.088388346
        %v1389 = vmul.f32 %v1158, 0.088388346
        %v1390 = vmul.f32 %v1162, 0.088388346
        %v1391 = vmul.f32 %v1168, 0.088388346
        %v1392 = vmul.f32 %v1172, 0.088388346
        %v1393 = vmul.f32 %v1178, 0.088388346
        %v1394 = vmul.f32 %v1182, 0.088388346
        %v1395 = vmul.f32 %v1188, 0.088388346
        %v1396 = vmul.f32 %v1192, 0.088388346
        %v1397 = vmul.f32 %v1198, 0.088388346
        %v1398 = vmul.f32 %v1202, 0.088388346
        %v1399 = vpack.c.bf16 %v1368, %v1367
        %v1400 = vpack.c.bf16 %v1370, %v1369
        %v1401 = vpack.c.bf16 %v1372, %v1371
        %v1402 = vpack.c.bf16 %v1374, %v1373
        %v1403 = vpack.c.bf16 %v1376, %v1375
        %v1404 = vpack.c.bf16 %v1378, %v1377
        %v1405 = vpack.c.bf16 %v1380, %v1379
        %v1406 = vpack.c.bf16 %v1382, %v1381
        %v1407 = vpack.c.bf16 %v1384, %v1383
        %v1408 = vpack.c.bf16 %v1386, %v1385
        %v1409 = vpack.c.bf16 %v1388, %v1387
        %v1410 = vpack.c.bf16 %v1390, %v1389
        %v1411 = vpack.c.bf16 %v1392, %v1391
        %v1412 = vpack.c.bf16 %v1394, %v1393
        %v1413 = vpack.c.bf16 %v1396, %v1395
        %v1414 = vpack.c.bf16 %v1398, %v1397
        %v1431 = vunpack.c.l.b16 %v1399
        %v1432 = vunpack.c.h.b16 %v1399
        %v1433 = vunpack.c.l.b16 %v1400
        %v1434 = vunpack.c.h.b16 %v1400
        %v1435 = vunpack.c.l.b16 %v1401
        %v1436 = vunpack.c.h.b16 %v1401
        %v1437 = vunpack.c.l.b16 %v1402
        %v1438 = vunpack.c.h.b16 %v1402
        %v1439 = vunpack.c.l.b16 %v1403
        %v1440 = vunpack.c.h.b16 %v1403
        %v1441 = vunpack.c.l.b16 %v1404
        %v1442 = vunpack.c.h.b16 %v1404
        %v1443 = vunpack.c.l.b16 %v1405
        %v1444 = vunpack.c.h.b16 %v1405
        %v1445 = vunpack.c.l.b16 %v1406
        %v1446 = vunpack.c.h.b16 %v1406
        %v1447 = vunpack.c.l.b16 %v1407
        %v1448 = vunpack.c.h.b16 %v1407
        %v1449 = vunpack.c.l.b16 %v1408
        %v1450 = vunpack.c.h.b16 %v1408
        %v1451 = vunpack.c.l.b16 %v1409
        %v1452 = vunpack.c.h.b16 %v1409
        %v1453 = vunpack.c.l.b16 %v1410
        %v1454 = vunpack.c.h.b16 %v1410
        %v1455 = vunpack.c.l.b16 %v1411
        %v1456 = vunpack.c.h.b16 %v1411
        %v1457 = vunpack.c.l.b16 %v1412
        %v1458 = vunpack.c.h.b16 %v1412
        %v1459 = vunpack.c.l.b16 %v1413
        %v1460 = vunpack.c.h.b16 %v1413
        %v1461 = vunpack.c.l.b16 %v1414
        %v1462 = vunpack.c.h.b16 %v1414
        %v1463 = vpack.c.b16 %v1431, %v1431
        %v1464 = vpack.c.b16 %v1432, %v1432
        %v1465 = vpack.c.b16 %v1433, %v1433
        %v1466 = vpack.c.b16 %v1434, %v1434
        %v1467 = vpack.c.b16 %v1435, %v1435
        %v1468 = vpack.c.b16 %v1436, %v1436
        %v1469 = vpack.c.b16 %v1437, %v1437
        %v1470 = vpack.c.b16 %v1438, %v1438
        %v1471 = vpack.c.b16 %v1439, %v1439
        %v1472 = vpack.c.b16 %v1440, %v1440
        %v1473 = vpack.c.b16 %v1441, %v1441
        %v1474 = vpack.c.b16 %v1442, %v1442
        %v1475 = vpack.c.b16 %v1443, %v1443
        %v1476 = vpack.c.b16 %v1444, %v1444
        %v1477 = vpack.c.b16 %v1445, %v1445
        %v1478 = vpack.c.b16 %v1446, %v1446
        %v1479 = vpack.c.b16 %v1447, %v1447
        %v1480 = vpack.c.b16 %v1448, %v1448
        %v1481 = vpack.c.b16 %v1449, %v1449
        %v1482 = vpack.c.b16 %v1450, %v1450
        %v1483 = vpack.c.b16 %v1451, %v1451
        %v1484 = vpack.c.b16 %v1452, %v1452
        %v1485 = vpack.c.b16 %v1453, %v1453
        %v1486 = vpack.c.b16 %v1454, %v1454
        %v1487 = vpack.c.b16 %v1455, %v1455
        %v1488 = vpack.c.b16 %v1456, %v1456
        %v1489 = vpack.c.b16 %v1457, %v1457
        %v1490 = vpack.c.b16 %v1458, %v1458
        %v1491 = vpack.c.b16 %v1459, %v1459
        %v1492 = vpack.c.b16 %v1460, %v1460
        %v1493 = vpack.c.b16 %v1461, %v1461
        %v1494 = vpack.c.b16 %v1462, %v1462
        %1527 = vst [vmem:[%s337] sm:$0xf] %v1463
        %1528 = vst [vmem:[%s337 + $0x4] sm:$0xf] %v1464
        %1529 = vst [vmem:[%s337 + $0x8] sm:$0xf] %v1465
        %1530 = vst [vmem:[%s337 + $0xc] sm:$0xf] %v1466
        %1531 = vst [vmem:[%s337 + $0x10] sm:$0xf] %v1467
        %1532 = vst [vmem:[%s337 + $0x14] sm:$0xf] %v1468
        %1533 = vst [vmem:[%s337 + $0x18] sm:$0xf] %v1469
        %1534 = vst [vmem:[%s337 + $0x1c] sm:$0xf] %v1470
        %1535 = vst [vmem:[%s337 + $0x20] sm:$0xf] %v1471
        %1536 = vst [vmem:[%s337 + $0x24] sm:$0xf] %v1472
        %1537 = vst [vmem:[%s337 + $0x28] sm:$0xf] %v1473
        %1538 = vst [vmem:[%s337 + $0x2c] sm:$0xf] %v1474
        %1539 = vst [vmem:[%s337 + $0x30] sm:$0xf] %v1475
        %1540 = vst [vmem:[%s337 + $0x34] sm:$0xf] %v1476
        %1541 = vst [vmem:[%s337 + $0x38] sm:$0xf] %v1477
        %1542 = vst [vmem:[%s337 + $0x3c] sm:$0xf] %v1478
        %1543 = vst [vmem:[%s337 + $0x40] sm:$0xf] %v1479
        %1544 = vst [vmem:[%s337 + $0x44] sm:$0xf] %v1480
        %1545 = vst [vmem:[%s337 + $0x48] sm:$0xf] %v1481
        %1546 = vst [vmem:[%s337 + $0x4c] sm:$0xf] %v1482
        %1547 = vst [vmem:[%s337 + $0x50] sm:$0xf] %v1483
        %1548 = vst [vmem:[%s337 + $0x54] sm:$0xf] %v1484
        %1549 = vst [vmem:[%s337 + $0x58] sm:$0xf] %v1485
        %1550 = vst [vmem:[%s337 + $0x5c] sm:$0xf] %v1486
        %1551 = vst [vmem:[%s337 + $0x60] sm:$0xf] %v1487
        %1552 = vst [vmem:[%s337 + $0x64] sm:$0xf] %v1488
        %1553 = vst [vmem:[%s337 + $0x68] sm:$0xf] %v1489
        %1554 = vst [vmem:[%s337 + $0x6c] sm:$0xf] %v1490
        %1555 = vst [vmem:[%s337 + $0x70] sm:$0xf] %v1491
        %1556 = vst [vmem:[%s337 + $0x74] sm:$0xf] %v1492
        %1557 = vst [vmem:[%s337 + $0x78] sm:$0xf] %v1493
        %1558 = vst [vmem:[%s337 + $0x7c] sm:$0xf] %v1494
        %v1559 = vpack.c.bf16 %v1054, %v1050
        %v1560 = vpack.c.bf16 %v1064, %v1060
        %v1561 = vpack.c.bf16 %v1074, %v1070
        %v1562 = vpack.c.bf16 %v1084, %v1080
        %v1563 = vpack.c.bf16 %v1094, %v1090
        %v1564 = vpack.c.bf16 %v1104, %v1100
        %v1565 = vpack.c.bf16 %v1114, %v1110
        %v1566 = vpack.c.bf16 %v1124, %v1120
        %v1567 = vpack.c.bf16 %v1134, %v1130
        %v1568 = vpack.c.bf16 %v1144, %v1140
        %v1569 = vpack.c.bf16 %v1154, %v1150
        %v1570 = vpack.c.bf16 %v1164, %v1160
        %v1571 = vpack.c.bf16 %v1174, %v1170
        %v1572 = vpack.c.bf16 %v1184, %v1180
        %v1573 = vpack.c.bf16 %v1194, %v1190
        %v1574 = vpack.c.bf16 %v1204, %v1200
        %v1591 = vunpack.c.l.b16 %v1559
        %v1592 = vunpack.c.h.b16 %v1559
        %v1593 = vunpack.c.l.b16 %v1560
        %v1594 = vunpack.c.h.b16 %v1560
        %v1595 = vunpack.c.l.b16 %v1561
        %v1596 = vunpack.c.h.b16 %v1561
        %v1597 = vunpack.c.l.b16 %v1562
        %v1598 = vunpack.c.h.b16 %v1562
        %v1599 = vunpack.c.l.b16 %v1563
        %v1600 = vunpack.c.h.b16 %v1563
        %v1601 = vunpack.c.l.b16 %v1564
        %v1602 = vunpack.c.h.b16 %v1564
        %v1603 = vunpack.c.l.b16 %v1565
        %v1604 = vunpack.c.h.b16 %v1565
        %v1605 = vunpack.c.l.b16 %v1566
        %v1606 = vunpack.c.h.b16 %v1566
        %v1607 = vunpack.c.l.b16 %v1567
        %v1608 = vunpack.c.h.b16 %v1567
        %v1609 = vunpack.c.l.b16 %v1568
        %v1610 = vunpack.c.h.b16 %v1568
        %v1611 = vunpack.c.l.b16 %v1569
        %v1612 = vunpack.c.h.b16 %v1569
        %v1613 = vunpack.c.l.b16 %v1570
        %v1614 = vunpack.c.h.b16 %v1570
        %v1615 = vunpack.c.l.b16 %v1571
        %v1616 = vunpack.c.h.b16 %v1571
        %v1617 = vunpack.c.l.b16 %v1572
        %v1618 = vunpack.c.h.b16 %v1572
        %v1619 = vunpack.c.l.b16 %v1573
        %v1620 = vunpack.c.h.b16 %v1573
        %v1621 = vunpack.c.l.b16 %v1574
        %v1622 = vunpack.c.h.b16 %v1574
        %v1623 = vpack.c.b16 %v1591, %v1591
        %v1624 = vpack.c.b16 %v1592, %v1592
        %v1625 = vpack.c.b16 %v1593, %v1593
        %v1626 = vpack.c.b16 %v1594, %v1594
        %v1627 = vpack.c.b16 %v1595, %v1595
        %v1628 = vpack.c.b16 %v1596, %v1596
        %v1629 = vpack.c.b16 %v1597, %v1597
        %v1630 = vpack.c.b16 %v1598, %v1598
        %v1631 = vpack.c.b16 %v1599, %v1599
        %v1632 = vpack.c.b16 %v1600, %v1600
        %v1633 = vpack.c.b16 %v1601, %v1601
        %v1634 = vpack.c.b16 %v1602, %v1602
        %v1635 = vpack.c.b16 %v1603, %v1603
        %v1636 = vpack.c.b16 %v1604, %v1604
        %v1637 = vpack.c.b16 %v1605, %v1605
        %v1638 = vpack.c.b16 %v1606, %v1606
        %v1639 = vpack.c.b16 %v1607, %v1607
        %v1640 = vpack.c.b16 %v1608, %v1608
        %v1641 = vpack.c.b16 %v1609, %v1609
        %v1642 = vpack.c.b16 %v1610, %v1610
        %v1643 = vpack.c.b16 %v1611, %v1611
        %v1644 = vpack.c.b16 %v1612, %v1612
        %v1645 = vpack.c.b16 %v1613, %v1613
        %v1646 = vpack.c.b16 %v1614, %v1614
        %v1647 = vpack.c.b16 %v1615, %v1615
        %v1648 = vpack.c.b16 %v1616, %v1616
        %v1649 = vpack.c.b16 %v1617, %v1617
        %v1650 = vpack.c.b16 %v1618, %v1618
        %v1651 = vpack.c.b16 %v1619, %v1619
        %v1652 = vpack.c.b16 %v1620, %v1620
        %v1653 = vpack.c.b16 %v1621, %v1621
        %v1654 = vpack.c.b16 %v1622, %v1622
        %1687 = vst [vmem:[%s344] sm:$0xf] %v1623
        %1688 = vst [vmem:[%s344 + $0x4] sm:$0xf] %v1624
        %1689 = vst [vmem:[%s344 + $0x8] sm:$0xf] %v1625
        %1690 = vst [vmem:[%s344 + $0xc] sm:$0xf] %v1626
        %1691 = vst [vmem:[%s344 + $0x10] sm:$0xf] %v1627
        %1692 = vst [vmem:[%s344 + $0x14] sm:$0xf] %v1628
        %1693 = vst [vmem:[%s344 + $0x18] sm:$0xf] %v1629
        %1694 = vst [vmem:[%s344 + $0x1c] sm:$0xf] %v1630
        %1695 = vst [vmem:[%s344 + $0x20] sm:$0xf] %v1631
        %1696 = vst [vmem:[%s344 + $0x24] sm:$0xf] %v1632
        %1697 = vst [vmem:[%s344 + $0x28] sm:$0xf] %v1633
        %1698 = vst [vmem:[%s344 + $0x2c] sm:$0xf] %v1634
        %1699 = vst [vmem:[%s344 + $0x30] sm:$0xf] %v1635
        %1700 = vst [vmem:[%s344 + $0x34] sm:$0xf] %v1636
        %1701 = vst [vmem:[%s344 + $0x38] sm:$0xf] %v1637
        %1702 = vst [vmem:[%s344 + $0x3c] sm:$0xf] %v1638
        %1703 = vst [vmem:[%s344 + $0x40] sm:$0xf] %v1639
        %1704 = vst [vmem:[%s344 + $0x44] sm:$0xf] %v1640
        %1705 = vst [vmem:[%s344 + $0x48] sm:$0xf] %v1641
        %1706 = vst [vmem:[%s344 + $0x4c] sm:$0xf] %v1642
        %1707 = vst [vmem:[%s344 + $0x50] sm:$0xf] %v1643
        %1708 = vst [vmem:[%s344 + $0x54] sm:$0xf] %v1644
        %1709 = vst [vmem:[%s344 + $0x58] sm:$0xf] %v1645
        %1710 = vst [vmem:[%s344 + $0x5c] sm:$0xf] %v1646
        %1711 = vst [vmem:[%s344 + $0x60] sm:$0xf] %v1647
        %1712 = vst [vmem:[%s344 + $0x64] sm:$0xf] %v1648
        %1713 = vst [vmem:[%s344 + $0x68] sm:$0xf] %v1649
        %1714 = vst [vmem:[%s344 + $0x6c] sm:$0xf] %v1650
        %1715 = vst [vmem:[%s344 + $0x70] sm:$0xf] %v1651
        %1716 = vst [vmem:[%s344 + $0x74] sm:$0xf] %v1652
        %1717 = vst [vmem:[%s344 + $0x78] sm:$0xf] %v1653
        %1718 = vst [vmem:[%s344 + $0x7c] sm:$0xf] %v1654
        %v1719 = vpack.c.bf16 %v1244, %v1241
        %v1720 = vpack.c.bf16 %v1252, %v1249
        %v1721 = vpack.c.bf16 %v1260, %v1257
        %v1722 = vpack.c.bf16 %v1268, %v1265
        %v1723 = vpack.c.bf16 %v1276, %v1273
        %v1724 = vpack.c.bf16 %v1284, %v1281
        %v1725 = vpack.c.bf16 %v1292, %v1289
        %v1726 = vpack.c.bf16 %v1300, %v1297
        %v1727 = vpack.c.bf16 %v1308, %v1305
        %v1728 = vpack.c.bf16 %v1316, %v1313
        %v1729 = vpack.c.bf16 %v1324, %v1321
        %v1730 = vpack.c.bf16 %v1332, %v1329
        %v1731 = vpack.c.bf16 %v1340, %v1337
        %v1732 = vpack.c.bf16 %v1348, %v1345
        %v1733 = vpack.c.bf16 %v1356, %v1353
        %v1734 = vpack.c.bf16 %v1364, %v1361
        %v1751 = vunpack.c.l.b16 %v1719
        %v1752 = vunpack.c.h.b16 %v1719
        %v1753 = vunpack.c.l.b16 %v1720
        %v1754 = vunpack.c.h.b16 %v1720
        %v1755 = vunpack.c.l.b16 %v1721
        %v1756 = vunpack.c.h.b16 %v1721
        %v1757 = vunpack.c.l.b16 %v1722
        %v1758 = vunpack.c.h.b16 %v1722
        %v1759 = vunpack.c.l.b16 %v1723
        %v1760 = vunpack.c.h.b16 %v1723
        %v1761 = vunpack.c.l.b16 %v1724
        %v1762 = vunpack.c.h.b16 %v1724
        %v1763 = vunpack.c.l.b16 %v1725
        %v1764 = vunpack.c.h.b16 %v1725
        %v1765 = vunpack.c.l.b16 %v1726
        %v1766 = vunpack.c.h.b16 %v1726
        %v1767 = vunpack.c.l.b16 %v1727
        %v1768 = vunpack.c.h.b16 %v1727
        %v1769 = vunpack.c.l.b16 %v1728
        %v1770 = vunpack.c.h.b16 %v1728
        %v1771 = vunpack.c.l.b16 %v1729
        %v1772 = vunpack.c.h.b16 %v1729
        %v1773 = vunpack.c.l.b16 %v1730
        %v1774 = vunpack.c.h.b16 %v1730
        %v1775 = vunpack.c.l.b16 %v1731
        %v1776 = vunpack.c.h.b16 %v1731
        %v1777 = vunpack.c.l.b16 %v1732
        %v1778 = vunpack.c.h.b16 %v1732
        %v1779 = vunpack.c.l.b16 %v1733
        %v1780 = vunpack.c.h.b16 %v1733
        %v1781 = vunpack.c.l.b16 %v1734
        %v1782 = vunpack.c.h.b16 %v1734
        %v1783 = vpack.c.b16 %v1751, %v1751
        %v1784 = vpack.c.b16 %v1752, %v1752
        %v1785 = vpack.c.b16 %v1753, %v1753
        %v1786 = vpack.c.b16 %v1754, %v1754
        %v1787 = vpack.c.b16 %v1755, %v1755
        %v1788 = vpack.c.b16 %v1756, %v1756
        %v1789 = vpack.c.b16 %v1757, %v1757
        %v1790 = vpack.c.b16 %v1758, %v1758
        %v1791 = vpack.c.b16 %v1759, %v1759
        %v1792 = vpack.c.b16 %v1760, %v1760
        %v1793 = vpack.c.b16 %v1761, %v1761
        %v1794 = vpack.c.b16 %v1762, %v1762
        %v1795 = vpack.c.b16 %v1763, %v1763
        %v1796 = vpack.c.b16 %v1764, %v1764
        %v1797 = vpack.c.b16 %v1765, %v1765
        %v1798 = vpack.c.b16 %v1766, %v1766
        %v1799 = vpack.c.b16 %v1767, %v1767
        %v1800 = vpack.c.b16 %v1768, %v1768
        %v1801 = vpack.c.b16 %v1769, %v1769
        %v1802 = vpack.c.b16 %v1770, %v1770
        %v1803 = vpack.c.b16 %v1771, %v1771
        %v1804 = vpack.c.b16 %v1772, %v1772
        %v1805 = vpack.c.b16 %v1773, %v1773
        %v1806 = vpack.c.b16 %v1774, %v1774
        %v1807 = vpack.c.b16 %v1775, %v1775
        %v1808 = vpack.c.b16 %v1776, %v1776
        %v1809 = vpack.c.b16 %v1777, %v1777
        %v1810 = vpack.c.b16 %v1778, %v1778
        %v1811 = vpack.c.b16 %v1779, %v1779
        %v1812 = vpack.c.b16 %v1780, %v1780
        %v1813 = vpack.c.b16 %v1781, %v1781
        %v1814 = vpack.c.b16 %v1782, %v1782
        %1847 = vst [vmem:[%s351] sm:$0xf] %v1783
        %1848 = vst [vmem:[%s351 + $0x4] sm:$0xf] %v1784
        %1849 = vst [vmem:[%s351 + $0x8] sm:$0xf] %v1785
        %1850 = vst [vmem:[%s351 + $0xc] sm:$0xf] %v1786
        %1851 = vst [vmem:[%s351 + $0x10] sm:$0xf] %v1787
        %1852 = vst [vmem:[%s351 + $0x14] sm:$0xf] %v1788
        %1853 = vst [vmem:[%s351 + $0x18] sm:$0xf] %v1789
        %1854 = vst [vmem:[%s351 + $0x1c] sm:$0xf] %v1790
        %1855 = vst [vmem:[%s351 + $0x20] sm:$0xf] %v1791
        %1856 = vst [vmem:[%s351 + $0x24] sm:$0xf] %v1792
        %1857 = vst [vmem:[%s351 + $0x28] sm:$0xf] %v1793
        %1858 = vst [vmem:[%s351 + $0x2c] sm:$0xf] %v1794
        %1859 = vst [vmem:[%s351 + $0x30] sm:$0xf] %v1795
        %1860 = vst [vmem:[%s351 + $0x34] sm:$0xf] %v1796
        %1861 = vst [vmem:[%s351 + $0x38] sm:$0xf] %v1797
        %1862 = vst [vmem:[%s351 + $0x3c] sm:$0xf] %v1798
        %1863 = vst [vmem:[%s351 + $0x40] sm:$0xf] %v1799
        %1864 = vst [vmem:[%s351 + $0x44] sm:$0xf] %v1800
        %1865 = vst [vmem:[%s351 + $0x48] sm:$0xf] %v1801
        %1866 = vst [vmem:[%s351 + $0x4c] sm:$0xf] %v1802
        %1867 = vst [vmem:[%s351 + $0x50] sm:$0xf] %v1803
        %1868 = vst [vmem:[%s351 + $0x54] sm:$0xf] %v1804
        %1869 = vst [vmem:[%s351 + $0x58] sm:$0xf] %v1805
        %1870 = vst [vmem:[%s351 + $0x5c] sm:$0xf] %v1806
        %1871 = vst [vmem:[%s351 + $0x60] sm:$0xf] %v1807
        %1872 = vst [vmem:[%s351 + $0x64] sm:$0xf] %v1808
        %1873 = vst [vmem:[%s351 + $0x68] sm:$0xf] %v1809
        %1874 = vst [vmem:[%s351 + $0x6c] sm:$0xf] %v1810
        %1875 = vst [vmem:[%s351 + $0x70] sm:$0xf] %v1811
        %1876 = vst [vmem:[%s351 + $0x74] sm:$0xf] %v1812
        %1877 = vst [vmem:[%s351 + $0x78] sm:$0xf] %v1813
        %1878 = vst [vmem:[%s351 + $0x7c] sm:$0xf] %v1814
        %s1879 = sand.u32 %s163, 1
        %s1880 = scalar_lea.sflag [#allocation4], %s1879
        %s1881 = sand.u32 %s163, 1
        %s1882 = smul.addr %s1881, 128
        %s1883 = scalar_lea.vmem [#allocation7], %s1882
        %s1884 = sand.u32 %s29, 1
        %s1885 = scalar_lea.sflag [#allocation9], %s1884
        %s1886 = sand.u32 %s191, 1
        %s1887 = smul.addr %s1886, 128
        %s1888 = scalar_lea.vmem [#allocation8], %s1887
        %s1889 = sand.u32 %s29, 1
        %s1890 = scalar_lea.sflag [#allocation9], %s1889
        %s1891 = sand.u32 %s219, 1
        %s1892 = smul.addr %s1891, 128
        %s1893 = scalar_lea.vmem [#allocation10], %s1892
        // Predicated region
        $region49: #{tpu_custom_call.1} parent=39 // pred_check
          %p1894 = pneg %p173
        $region50: #{tpu_custom_call.1} parent=39 // pred_check_branch
          %1896 = sbr.rel (%p1894) target = $region52
        $region51: #{tpu_custom_call.1} parent=39 // pred_region
          %s1897 = smul.u32 32, %s34
          %s1899 = ssub.s32 2048, 2048
          %1900 = vsyncadd %s1880, %s1899
          %s1901 = smul.addr %s33, 64
          %s1902 = sadd.s32 %s1897, %s1901
          %s1903 = smul.addr %s1902, 64
          %s1904 = scalar_lea.hbm %s5, %s1903
          %s1905 = sshll.u32 %s1883, 4
          %s1906 = int_to_ptr.vmem [resolvable:$true] %s1905
          %1911 = dma.vmem_to_hbm [thread:$0]  %s1906, 2048, %s1904, %s1880, 64, 64, 4
        $region52: #{tpu_custom_call.1} parent=39 // pred_fallthru
          _
        // Predicated region
        $region53: #{tpu_custom_call.1} parent=39 // pred_check
          %p1912 = pneg %p201
        $region54: #{tpu_custom_call.1} parent=39 // pred_check_branch
          %1914 = sbr.rel (%p1912) target = $region56
        $region55: #{tpu_custom_call.1} parent=39 // pred_region
          %s1915 = smul.u32 32, %s34
          %s1917 = ssub.s32 2048, 2048
          %1918 = vsyncadd %s1885, %s1917
          %s1919 = smul.addr %s33, 64
          %s1920 = sadd.s32 %s1915, %s1919
          %s1921 = smul.addr %s1920, 64
          %s1922 = scalar_lea.hbm %s6, %s1921
          %s1923 = sshll.u32 %s1888, 4
          %s1924 = int_to_ptr.vmem [resolvable:$true] %s1923
          %1929 = dma.vmem_to_hbm [thread:$0]  %s1924, 2048, %s1922, %s1885, 64, 64, 4
        $region56: #{tpu_custom_call.1} parent=39 // pred_fallthru
          _
        // Predicated region
        $region57: #{tpu_custom_call.1} parent=39 // pred_check
          %p1930 = pneg %p229
        $region58: #{tpu_custom_call.1} parent=39 // pred_check_branch
          %1932 = sbr.rel (%p1930) target = $region60
        $region59: #{tpu_custom_call.1} parent=39 // pred_region
          %s1933 = smul.u32 32, %s34
          %s1935 = ssub.s32 2048, 2048
          %1936 = vsyncadd %s1890, %s1935
          %s1937 = smul.addr %s33, 64
          %s1938 = sadd.s32 %s1933, %s1937
          %s1939 = smul.addr %s1938, 64
          %s1940 = scalar_lea.hbm %s7, %s1939
          %s1941 = sshll.u32 %s1893, 4
          %s1942 = int_to_ptr.vmem [resolvable:$true] %s1941
          %1947 = dma.vmem_to_hbm [thread:$0]  %s1942, 2048, %s1940, %s1890, 64, 64, 4
        $region60: #{tpu_custom_call.1} parent=39 // pred_fallthru
          _
      $region40: #{tpu_custom_call.1} parent=5 // pred_fallthru
        _
      %p1948 = scmp.le.s32.totalorder 2, %s24
      // Predicated region
      $region61: #{tpu_custom_call.1} parent=5 // pred_check
        %p1949 = pneg %p1948
      $region62: #{tpu_custom_call.1} parent=5 // pred_check_branch
        %1951 = sbr.rel (%p1949) target = $region64
      $region63: #{tpu_custom_call.1} parent=5 // pred_region
        %s1952 = ssub.s32 %s24, 2
        // Predicated region
        $region65: #{tpu_custom_call.1} parent=63 // pred_check
          %p1953 = pneg %p179
        $region66: #{tpu_custom_call.1} parent=63 // pred_check_branch
          %1955 = sbr.rel (%p1953) target = $region68
        $region67: #{tpu_custom_call.1} parent=63 // pred_region
          %s1956 = sand.u32 %s164, 1
          %s1957 = scalar_lea.sflag [#allocation4], %s1956
          %s1958 = sand.u32 %s164, 1
          %s1959 = smul.addr %s1958, 128
          %s1960 = scalar_lea.vmem [#allocation7], %s1959
          %1961 = dma.done %s1957, 2048
        $region68: #{tpu_custom_call.1} parent=63 // pred_fallthru
          _
        // Predicated region
        $region69: #{tpu_custom_call.1} parent=63 // pred_check
          %p1962 = pneg %p207
        $region70: #{tpu_custom_call.1} parent=63 // pred_check_branch
          %1964 = sbr.rel (%p1962) target = $region72
        $region71: #{tpu_custom_call.1} parent=63 // pred_region
          %s1965 = sand.u32 %s30, 1
          %s1966 = scalar_lea.sflag [#allocation9], %s1965
          %s1967 = sand.u32 %s192, 1
          %s1968 = smul.addr %s1967, 128
          %s1969 = scalar_lea.vmem [#allocation8], %s1968
          %1970 = dma.done %s1966, 2048
        $region72: #{tpu_custom_call.1} parent=63 // pred_fallthru
          _
        // Predicated region
        $region73: #{tpu_custom_call.1} parent=63 // pred_check
          %p1971 = pneg %p235
        $region74: #{tpu_custom_call.1} parent=63 // pred_check_branch
          %1973 = sbr.rel (%p1971) target = $region76
        $region75: #{tpu_custom_call.1} parent=63 // pred_region
          %s1974 = sand.u32 %s30, 1
          %s1975 = scalar_lea.sflag [#allocation9], %s1974
          %s1976 = sand.u32 %s220, 1
          %s1977 = smul.addr %s1976, 128
          %s1978 = scalar_lea.vmem [#allocation10], %s1977
          %1979 = dma.done %s1975, 2048
        $region76: #{tpu_custom_call.1} parent=63 // pred_fallthru
          _
      $region64: #{tpu_custom_call.1} parent=5 // pred_fallthru
        _
    $region6: #{tpu_custom_call.1} parent=1 // loop_footer
      %s28 = sadd.s32 1, %s24
    $region7: #{tpu_custom_call.1} parent=1 // loop_footer_branch
      %23 = sbr.rel target = $region3
    $region8: #{tpu_custom_call.1} parent=1 // loop_exit
      _
    %1980 = vsyncpa [#allocation3], 1
    %s1981 = scalar_lea.sflag [#allocation3], 1
    %1982 = vsyncpa %s1981, 1
    %1983 = vsyncpa [#allocation6], 1
    %1984 = vsyncpa [#allocation4], 1
    %s1985 = scalar_lea.sflag [#allocation4], 1
    %1986 = vsyncpa %s1985, 1
    %1987 = vsyncpa [#allocation9], 1
    %s1988 = scalar_lea.sflag [#allocation9], 1
    %1989 = vsyncpa %s1988, 1

</llo_original>
